<compile_context>
chip_gen: v5e
topology: v5e:2x2
jax: 0.10.0
libtpu: 0.0.40
codegen_flags: <defaults>
</compile_context>

<pallas_src>
import math
import functools

import jax
import jax.numpy as jnp
from jax.experimental import pallas as pl
from jax.experimental.pallas import tpu as pltpu

_VMEM_LIMIT = 48 * 1024 * 1024  # headroom below v7x's 64 MiB physical VMEM


# ----------------------------------------------------------------------------
# Tile helpers: biggest aligned tile that divides the dim, else the full axis.
# (Production code would pad; the test shapes here are tiny so full-axis is fine.)
# ----------------------------------------------------------------------------
def _tile_rows(dim, pref):
    for t in (pref, 512, 256, 128, 64, 32, 16, 8):
        if t <= pref and dim % t == 0:
            return t
    return dim


def _tile_lanes(dim, pref):
    for t in (pref, 1024, 512, 256, 128):
        if t <= pref and dim % t == 0:
            return t
    return dim


# ----------------------------------------------------------------------------
# Pallas kernels
# ----------------------------------------------------------------------------
def _inproj_pe_kernel(x_ref, w_ref, b_ref, pe_ref, o_ref, *, pos_scale):
    # x: (1, S, In) f32, w: (In, tn) bf16, b: (1, tn) f32, pe: (S, tn) f32
    x = x_ref[0]
    y = (
        jnp.dot(x.astype(w_ref.dtype), w_ref[...], preferred_element_type=jnp.float32)
        + b_ref[...]
    )
    o_ref[0] = (y + pos_scale * pe_ref[...]).astype(o_ref.dtype)


def _ln_matmul_kernel(x_ref, g_ref, b_ref, w_ref, bias_ref, o_ref, xn_ref, *, eps):
    # Fused LayerNorm(x) @ W + bias.  LN computed once per row-tile (cached at j == 0).
    j = pl.program_id(1)

    @pl.when(j == 0)
    def _():
        x = x_ref[...]
        mean = jnp.mean(x, axis=-1, keepdims=True)
        var = jnp.mean((x - mean) ** 2, axis=-1, keepdims=True)
        xn = (x - mean) * jax.lax.rsqrt(var + eps)
        xn = xn * g_ref[...] + b_ref[...]
        xn_ref[...] = xn.astype(xn_ref.dtype)

    y = (
        jnp.dot(xn_ref[...], w_ref[...], preferred_element_type=jnp.float32)
        + bias_ref[...]
    )
    o_ref[...] = y.astype(o_ref.dtype)


def _matmul_res_kernel(x_ref, w_ref, bias_ref, res_ref, o_ref):
    # x @ W + bias + residual   (attention output projection fused with residual add)
    y = (
        jnp.dot(x_ref[...], w_ref[...], preferred_element_type=jnp.float32)
        + bias_ref[...]
        + res_ref[...]
    )
    o_ref[...] = y.astype(o_ref.dtype)


def _ln_swiglu_kernel(
    x_ref, g_ref, b_ref, w1_ref, b1_ref, w3_ref, b3_ref, w2_ref, b2_ref, res_ref,
    o_ref, xn_ref, acc_ref, *, eps
):
    # out = silu(LN(x)@W1+b1) * (LN(x)@W3+b3) @ W2 + b2 + residual
    # grid = (M tiles, D tiles, d_ff tiles); d_ff axis is a reduction into acc_ref.
    f = pl.program_id(2)

    @pl.when(f == 0)
    def _():
        x = x_ref[...]
        mean = jnp.mean(x, axis=-1, keepdims=True)
        var = jnp.mean((x - mean) ** 2, axis=-1, keepdims=True)
        xn = (x - mean) * jax.lax.rsqrt(var + eps)
        xn = xn * g_ref[...] + b_ref[...]
        xn_ref[...] = xn.astype(xn_ref.dtype)
        acc_ref[...] = jnp.zeros(acc_ref.shape, acc_ref.dtype)

    xn = xn_ref[...]
    a = jnp.dot(xn, w1_ref[...], preferred_element_type=jnp.float32) + b1_ref[...]
    g = jnp.dot(xn, w3_ref[...], preferred_element_type=jnp.float32) + b3_ref[...]
    h = (a * jax.nn.sigmoid(a)) * g  # SiLU(a) * gate, f32 on the VPU/EUP
    acc_ref[...] += jnp.dot(
        h.astype(w2_ref.dtype), w2_ref[...], preferred_element_type=jnp.float32
    )

    @pl.when(f == pl.num_programs(2) - 1)
    def _():
        o_ref[...] = (acc_ref[...] + b2_ref[...] + res_ref[...]).astype(o_ref.dtype)


def _flash_attn_kernel(q_ref, k_ref, v_ref, o_ref, m_sc, l_sc, acc_sc, *, scale):
    # Flash attention (non-causal encoder self-attention), one (batch*head) per grid row,
    # KV axis is the reduction; running max/sum/acc live in VMEM scratch.
    kv = pl.program_id(2)

    @pl.when(kv == 0)
    def _():
        m_sc[...] = jnp.full(m_sc.shape, -jnp.inf, jnp.float32)
        l_sc[...] = jnp.zeros(l_sc.shape, jnp.float32)
        acc_sc[...] = jnp.zeros(acc_sc.shape, jnp.float32)

    q = q_ref[0]  # (tq, Dh) bf16
    k = k_ref[0]  # (tk, Dh) bf16
    v = v_ref[0]  # (tk, Dh) bf16

    s = jax.lax.dot_general(
        q, k, (((1,), (1,)), ((), ())), preferred_element_type=jnp.float32
    ) * scale  # (tq, tk) f32

    m_prev = m_sc[...]
    m_new = jnp.maximum(m_prev, jnp.max(s, axis=-1, keepdims=True))
    alpha = jnp.exp(m_prev - m_new)
    p = jnp.exp(s - m_new)
    l_sc[...] = alpha * l_sc[...] + jnp.sum(p, axis=-1, keepdims=True)
    acc_sc[...] = alpha * acc_sc[...] + jnp.dot(
        p.astype(v.dtype), v, preferred_element_type=jnp.float32
    )
    m_sc[...] = m_new

    @pl.when(kv == pl.num_programs(2) - 1)
    def _():
        inv = pl.reciprocal(l_sc[...], approx=True)
        o_ref[0] = (acc_sc[...] * inv).astype(o_ref.dtype)


def _layernorm_kernel(x_ref, g_ref, b_ref, o_ref, *, eps):
    x = x_ref[...]
    mean = jnp.mean(x, axis=-1, keepdims=True)
    var = jnp.mean((x - mean) ** 2, axis=-1, keepdims=True)
    xn = (x - mean) * jax.lax.rsqrt(var + eps)
    o_ref[...] = (xn * g_ref[...] + b_ref[...]).astype(o_ref.dtype)


# ----------------------------------------------------------------------------
# pallas_call wrappers
# ----------------------------------------------------------------------------
def input_proj_pe(src, w, bias, pe, pos_scale):
    # src: (B, S, In) f32; w: (In, D) bf16; pe: (S, D) f32
    B, S, In = src.shape
    D = w.shape[1]
    tn = _tile_lanes(D, 256)
    kern = functools.partial(_inproj_pe_kernel, pos_scale=pos_scale)
    return pl.pallas_call(
        kern,
        grid=(B, D // tn),
        in_specs=[
            pl.BlockSpec((1, S, In), lambda b, j: (b, 0, 0)),
            pl.BlockSpec((In, tn), lambda b, j: (0, j)),
            pl.BlockSpec((1, tn), lambda b, j: (0, j)),
            pl.BlockSpec((S, tn), lambda b, j: (0, j)),
        ],
        out_specs=pl.BlockSpec((1, S, tn), lambda b, j: (b, 0, j)),
        out_shape=jax.ShapeDtypeStruct((B, S, D), jnp.float32),
        compiler_params=pltpu.CompilerParams(
            dimension_semantics=("parallel", "parallel"),
            vmem_limit_bytes=_VMEM_LIMIT,
        ),
    )(src, w, bias.reshape(1, D), pe)


def ln_matmul(x2d, gamma, beta, w, bias, *, eps=1e-5, out_dtype=jnp.float32):
    # LayerNorm(x) @ W + bias, tiled over (rows, out-cols); K = d_model stays whole
    # so LN can be computed in-kernel (d_model row tiles fit VMEM comfortably).
    M, D = x2d.shape
    N = w.shape[1]
    tm = _tile_rows(M, 256)
    tn = _tile_lanes(N, 256)
    kern = functools.partial(_ln_matmul_kernel, eps=eps)
    return pl.pallas_call(
        kern,
        grid=(M // tm, N // tn),
        in_specs=[
            pl.BlockSpec((tm, D), lambda i, j: (i, 0)),
            pl.BlockSpec((1, D), lambda i, j: (0, 0)),
            pl.BlockSpec((1, D), lambda i, j: (0, 0)),
            pl.BlockSpec((D, tn), lambda i, j: (0, j)),
            pl.BlockSpec((1, tn), lambda i, j: (0, j)),
        ],
        out_specs=pl.BlockSpec((tm, tn), lambda i, j: (i, j)),
        out_shape=jax.ShapeDtypeStruct((M, N), out_dtype),
        scratch_shapes=[pltpu.VMEM((tm, D), jnp.bfloat16)],
        compiler_params=pltpu.CompilerParams(
            # j kept sequential so the LN result cached at j == 0 is valid for j > 0.
            dimension_semantics=("parallel", "arbitrary"),
            vmem_limit_bytes=_VMEM_LIMIT,
        ),
    )(x2d, gamma.reshape(1, D), beta.reshape(1, D), w, bias.reshape(1, N))


def matmul_residual(x2d, w, bias, res, *, out_dtype=jnp.float32):
    # x @ W + bias + res, tiled over (rows, out-cols).
    M, K = x2d.shape
    N = w.shape[1]
    tm = _tile_rows(M, 256)
    tn = _tile_lanes(N, 256)
    return pl.pallas_call(
        _matmul_res_kernel,
        grid=(M // tm, N // tn),
        in_specs=[
            pl.BlockSpec((tm, K), lambda i, j: (i, 0)),
            pl.BlockSpec((K, tn), lambda i, j: (0, j)),
            pl.BlockSpec((1, tn), lambda i, j: (0, j)),
            pl.BlockSpec((tm, tn), lambda i, j: (i, j)),
        ],
        out_specs=pl.BlockSpec((tm, tn), lambda i, j: (i, j)),
        out_shape=jax.ShapeDtypeStruct((M, N), out_dtype),
        compiler_params=pltpu.CompilerParams(
            dimension_semantics=("parallel", "parallel"),
            vmem_limit_bytes=_VMEM_LIMIT,
        ),
    )(x2d, w, bias.reshape(1, N), res)


def ln_swiglu_residual(x2d, gamma, beta, w1, b1, w3, b3, w2, b2, res, *, eps=1e-5):
    M, D = x2d.shape
    F = w1.shape[1]
    tm = _tile_rows(M, 256)
    tn = _tile_lanes(D, 256)
    tf = _tile_lanes(F, 512)
    kern = functools.partial(_ln_swiglu_kernel, eps=eps)
    return pl.pallas_call(
        kern,
        grid=(M // tm, D // tn, F // tf),
        in_specs=[
            pl.BlockSpec((tm, D), lambda i, j, f: (i, 0)),
            pl.BlockSpec((1, D), lambda i, j, f: (0, 0)),
            pl.BlockSpec((1, D), lambda i, j, f: (0, 0)),
            pl.BlockSpec((D, tf), lambda i, j, f: (0, f)),
            pl.BlockSpec((1, tf), lambda i, j, f: (0, f)),
            pl.BlockSpec((D, tf), lambda i, j, f: (0, f)),
            pl.BlockSpec((1, tf), lambda i, j, f: (0, f)),
            pl.BlockSpec((tf, tn), lambda i, j, f: (f, j)),
            pl.BlockSpec((1, tn), lambda i, j, f: (0, j)),
            pl.BlockSpec((tm, tn), lambda i, j, f: (i, j)),
        ],
        out_specs=pl.BlockSpec((tm, tn), lambda i, j, f: (i, j)),
        out_shape=jax.ShapeDtypeStruct((M, D), jnp.float32),
        scratch_shapes=[
            pltpu.VMEM((tm, D), jnp.bfloat16),   # cached LN(x)
            pltpu.VMEM((tm, tn), jnp.float32),   # W2 accumulator
        ],
        compiler_params=pltpu.CompilerParams(
            dimension_semantics=("parallel", "parallel", "arbitrary"),
            vmem_limit_bytes=_VMEM_LIMIT,
        ),
    )(
        x2d, gamma.reshape(1, D), beta.reshape(1, D),
        w1, b1.reshape(1, F), w3, b3.reshape(1, F),
        w2, b2.reshape(1, D), res,
    )


def flash_attention(q, k, v):
    # q, k, v: (B*H, S, Dh) bf16 -> (B*H, S, Dh) bf16
    BH, Sq, Dh = q.shape
    Sk = k.shape[1]
    scale = 1.0 / math.sqrt(Dh)
    tq = _tile_rows(Sq, 128)
    tk = _tile_rows(Sk, 128)
    kern = functools.partial(_flash_attn_kernel, scale=scale)
    return pl.pallas_call(
        kern,
        grid=(BH, Sq // tq, Sk // tk),
        in_specs=[
            pl.BlockSpec((1, tq, Dh), lambda b, qi, ki: (b, qi, 0)),
            pl.BlockSpec((1, tk, Dh), lambda b, qi, ki: (b, ki, 0)),
            pl.BlockSpec((1, tk, Dh), lambda b, qi, ki: (b, ki, 0)),
        ],
        out_specs=pl.BlockSpec((1, tq, Dh), lambda b, qi, ki: (b, qi, 0)),
        out_shape=jax.ShapeDtypeStruct((BH, Sq, Dh), jnp.bfloat16),
        scratch_shapes=[
            pltpu.VMEM((tq, 1), jnp.float32),    # running max
            pltpu.VMEM((tq, 1), jnp.float32),    # running sum
            pltpu.VMEM((tq, Dh), jnp.float32),   # output accumulator
        ],
        compiler_params=pltpu.CompilerParams(
            dimension_semantics=("parallel", "parallel", "arbitrary"),
            vmem_limit_bytes=_VMEM_LIMIT,
        ),
    )(q, k, v)


def layernorm(x2d, gamma, beta, *, eps=1e-5):
    M, D = x2d.shape
    tm = _tile_rows(M, 512)
    kern = functools.partial(_layernorm_kernel, eps=eps)
    return pl.pallas_call(
        kern,
        grid=(M // tm,),
        in_specs=[
            pl.BlockSpec((tm, D), lambda i: (i, 0)),
            pl.BlockSpec((1, D), lambda i: (0, 0)),
            pl.BlockSpec((1, D), lambda i: (0, 0)),
        ],
        out_specs=pl.BlockSpec((tm, D), lambda i: (i, 0)),
        out_shape=jax.ShapeDtypeStruct((M, D), jnp.float32),
        compiler_params=pltpu.CompilerParams(
            dimension_semantics=("parallel",),
            vmem_limit_bytes=_VMEM_LIMIT,
        ),
    )(x2d, gamma.reshape(1, D), beta.reshape(1, D))


# ----------------------------------------------------------------------------
# Encoder layer / encoder forward (pre-norm, eval mode -> dropout = identity)
# ----------------------------------------------------------------------------
def encoder_layer(x, p, nhead):
    B, S, D = x.shape
    M = B * S
    H = nhead
    Dh = D // H
    x2d = x.reshape(M, D)

    # 1) fused LayerNorm1 + packed QKV projection (bf16 output feeds the MXU directly)
    qkv = ln_matmul(x2d, p["ln1_g"], p["ln1_b"], p["wqkv"], p["bqkv"],
                    out_dtype=jnp.bfloat16)                        # (M, 3D) bf16

    # head split (XLA reshape/transpose; see TODO at top)
    qkv = qkv.reshape(B, S, 3, H, Dh).transpose(2, 0, 3, 1, 4)      # (3, B, H, S, Dh)
    q = qkv[0].reshape(B * H, S, Dh)
    k = qkv[1].reshape(B * H, S, Dh)
    v = qkv[2].reshape(B * H, S, Dh)

    # 2) flash self-attention (non-causal)
    attn = flash_attention(q, k, v)                                 # (B*H, S, Dh) bf16
    attn = attn.reshape(B, H, S, Dh).transpose(0, 2, 1, 3).reshape(M, D)

    # 3) output projection fused with residual add
    x2d = matmul_residual(attn, p["wo"], p["bo"], x2d)              # (M, D) f32

    # 4) fused LayerNorm2 + SwiGLU FFN + residual
    x2d = ln_swiglu_residual(
        x2d, p["ln2_g"], p["ln2_b"],
        p["ffn"]["w1"], p["ffn"]["b1"],
        p["ffn"]["w3"], p["ffn"]["b3"],
        p["ffn"]["w2"], p["ffn"]["b2"],
        x2d,
    )                                                               # (M, D) f32
    return x2d.reshape(B, S, D)


def transformer_encoder(src, params, nhead, pos_scale=1.0):
    B, S, _ = src.shape
    D = params["in_w"].shape[1]
    # input projection + positional encoding (+ dropout = identity in eval)
    x = input_proj_pe(src, params["in_w"], params["in_b"], params["pe"][:S], pos_scale)
    # encoder layers (pre-norm)
    for lp in params["layers"]:
        x = encoder_layer(x, lp, nhead)
    # final norm
    x2d = layernorm(x.reshape(B * S, D), params["fn_g"], params["fn_b"])
    return x2d.reshape(B, S, D)


# ----------------------------------------------------------------------------
# Deterministic parameter initialization (xavier weights -> bf16, f32 biases/LN)
# ----------------------------------------------------------------------------
def _xavier(key, shape):
    fan_in, fan_out = shape
    limit = math.sqrt(6.0 / (fan_in + fan_out))
    return jax.random.uniform(key, shape, jnp.float32, -limit, limit)


def _sinusoidal_pe(max_len, d_model):
    pos = jnp.arange(max_len, dtype=jnp.float32)[:, None]
    div = jnp.exp(
        jnp.arange(0, d_model, 2, dtype=jnp.float32) * (-math.log(10000.0) / d_model)
    )
    pe = jnp.zeros((max_len, d_model), jnp.float32)
    pe = pe.at[:, 0::2].set(jnp.sin(pos * div))
    pe = pe.at[:, 1::2].set(jnp.cos(pos * div))
    return pe


def init_params(key, input_size, d_model, nhead, num_layers, dim_feedforward,
                max_seq_len=64):
    keys = iter(jax.random.split(key, 8 * num_layers + 4))

    layers = []
    for _ in range(num_layers):
        wq = _xavier(next(keys), (d_model, d_model))
        wk = _xavier(next(keys), (d_model, d_model))
        wv = _xavier(next(keys), (d_model, d_model))
        layers.append({
            "ln1_g": jnp.ones((d_model,), jnp.float32),
            "ln1_b": jnp.zeros((d_model,), jnp.float32),
            "ln2_g": jnp.ones((d_model,), jnp.float32),
            "ln2_b": jnp.zeros((d_model,), jnp.float32),
            "wqkv": jnp.concatenate([wq, wk, wv], axis=1).astype(jnp.bfloat16),
            "bqkv": jnp.zeros((3 * d_model,), jnp.float32),
            "wo": _xavier(next(keys), (d_model, d_model)).astype(jnp.bfloat16),
            "bo": jnp.zeros((d_model,), jnp.float32),
            "ffn": {
                "w1": _xavier(next(keys), (d_model, dim_feedforward)).astype(jnp.bfloat16),
                "b1": jnp.zeros((dim_feedforward,), jnp.float32),
                "w3": _xavier(next(keys), (d_model, dim_feedforward)).astype(jnp.bfloat16),
                "b3": jnp.zeros((dim_feedforward,), jnp.float32),
                "w2": _xavier(next(keys), (dim_feedforward, d_model)).astype(jnp.bfloat16),
                "b2": jnp.zeros((d_model,), jnp.float32),
            },
        })

    return {
        "in_w": _xavier(next(keys), (input_size, d_model)).astype(jnp.bfloat16),
        "in_b": jnp.zeros((d_model,), jnp.float32),
        "fn_g": jnp.ones((d_model,), jnp.float32),
        "fn_b": jnp.zeros((d_model,), jnp.float32),
        "pe": _sinusoidal_pe(max_seq_len, d_model),
        "layers": layers,
    }


# ----------------------------------------------------------------------------
if __name__ == "__main__":
    # small config consistent with the module
    B, S = 2, 8
    input_size = 16
    d_model, nhead, num_layers, dim_ff = 32, 4, 2, 64

    key = jax.random.PRNGKey(0)
    k_p, k_s = jax.random.split(key)

    params = init_params(k_p, input_size, d_model, nhead, num_layers, dim_ff)
    src = jax.random.normal(k_s, (B, S, input_size), jnp.float32)

    fwd = jax.jit(functools.partial(transformer_encoder, nhead=nhead))
    out = fwd(src, params)
    jax.block_until_ready(out)

    assert out.shape == (B, S, d_model)
    assert bool(jnp.all(jnp.isfinite(out)))
    print("KERNEL_OK")
</pallas_src>

<mosaic_0001>
module attributes {stable_mosaic.version = 11 : i64} {
  func.func @_inproj_pe_kernel(%arg0: i32, %arg1: i32, %arg2: memref<1x8x16xf32, #tpu.memory_space<vmem>>, %arg3: memref<16x32xbf16, #tpu.memory_space<vmem>>, %arg4: memref<1x32xf32, #tpu.memory_space<vmem>>, %arg5: memref<8x32xf32, #tpu.memory_space<vmem>>, %arg6: memref<1x8x32xf32, #tpu.memory_space<vmem>>) attributes {dimension_semantics = [#tpu.dimension_semantics<parallel>, #tpu.dimension_semantics<parallel>], iteration_bounds = array<i64: 2, 1>, scalar_prefetch = 0 : i64, scratch_operands = 0 : i64, tpu.core_type = #tpu.core_type<tc>, window_params = [{transform_indices = @transform_0, window_bounds = array<i64: 1, 8, 16>}, {transform_indices = @transform_1, window_bounds = array<i64: 16, 32>}, {transform_indices = @transform_2, window_bounds = array<i64: 1, 32>}, {transform_indices = @transform_3, window_bounds = array<i64: 8, 32>}, {transform_indices = @transform_4, window_bounds = array<i64: 1, 8, 32>}]} {
    %c0 = arith.constant 0 : index
    %c0_0 = arith.constant 0 : index
    %c0_1 = arith.constant 0 : index
    %0 = vector.load %arg2[%c0, %c0_0, %c0_1] : memref<1x8x16xf32, #tpu.memory_space<vmem>>, vector<1x8x16xf32>
    %1 = vector.shape_cast %0 : vector<1x8x16xf32> to vector<8x16xf32>
    %2 = arith.truncf %1 : vector<8x16xf32> to vector<8x16xbf16>
    %c0_2 = arith.constant 0 : index
    %c0_3 = arith.constant 0 : index
    %3 = vector.load %arg3[%c0_2, %c0_3] : memref<16x32xbf16, #tpu.memory_space<vmem>>, vector<16x32xbf16>
    %cst = arith.constant dense<0.000000e+00> : vector<8x32xf32>
    %4 = tpu.matmul %2, %3, %cst {dimension_numbers = #tpu.dot_dimension_numbers<[1], [0], [0], [1], [0, 0, 1, 1], [], []>} : vector<8x16xbf16>, vector<16x32xbf16>, vector<8x32xf32> -> vector<8x32xf32>
    %c0_4 = arith.constant 0 : index
    %c0_5 = arith.constant 0 : index
    %5 = vector.load %arg4[%c0_4, %c0_5] : memref<1x32xf32, #tpu.memory_space<vmem>>, vector<1x32xf32>
    %6 = vector.broadcast %5 : vector<1x32xf32> to vector<8x32xf32>
    %7 = arith.addf %4, %6 : vector<8x32xf32>
    %c0_6 = arith.constant 0 : index
    %c0_7 = arith.constant 0 : index
    %8 = vector.load %arg5[%c0_6, %c0_7] : memref<8x32xf32, #tpu.memory_space<vmem>>, vector<8x32xf32>
    %cst_8 = arith.constant 1.000000e+00 : f32
    %9 = vector.broadcast %cst_8 : f32 to vector<8x32xf32>
    %10 = arith.mulf %9, %8 : vector<8x32xf32>
    %11 = arith.addf %7, %10 : vector<8x32xf32>
    %c0_9 = arith.constant 0 : index
    %c0_10 = arith.constant 0 : index
    %c0_11 = arith.constant 0 : index
    %12 = vector.load %arg6[%c0_9, %c0_10, %c0_11] : memref<1x8x32xf32, #tpu.memory_space<vmem>>, vector<1x8x32xf32>
    %13 = vector.shape_cast %12 : vector<1x8x32xf32> to vector<8x32xf32>
    %14 = vector.shape_cast %11 : vector<8x32xf32> to vector<1x8x32xf32>
    tpu.vector_store %arg6[%c0_9, %c0_10, %c0_11], %14 {strides = array<i32>} : memref<1x8x32xf32, #tpu.memory_space<vmem>>, vector<1x8x32xf32>,
    return
  }
  func.func @transform_0(%arg0: i32, %arg1: i32) -> (i32, i32, i32) {
    %c0_i32 = arith.constant 0 : i32
    %c0_i32_0 = arith.constant 0 : i32
    %c0_i32_1 = arith.constant 0 : i32
    return %arg0, %c0_i32, %c0_i32_0 : i32, i32, i32
  }
  func.func @transform_1(%arg0: i32, %arg1: i32) -> (i32, i32) {
    %c0_i32 = arith.constant 0 : i32
    %c0_i32_0 = arith.constant 0 : i32
    return %c0_i32, %arg1 : i32, i32
  }
  func.func @transform_2(%arg0: i32, %arg1: i32) -> (i32, i32) {
    %c0_i32 = arith.constant 0 : i32
    %c0_i32_0 = arith.constant 0 : i32
    return %c0_i32, %arg1 : i32, i32
  }
  func.func @transform_3(%arg0: i32, %arg1: i32) -> (i32, i32) {
    %c0_i32 = arith.constant 0 : i32
    %c0_i32_0 = arith.constant 0 : i32
    return %c0_i32, %arg1 : i32, i32
  }
  func.func @transform_4(%arg0: i32, %arg1: i32) -> (i32, i32, i32) {
    %c0_i32 = arith.constant 0 : i32
    %c0_i32_0 = arith.constant 0 : i32
    return %arg0, %c0_i32, %arg1 : i32, i32, i32
  }
}

module attributes {stable_mosaic.version = 11 : i64} {
  func.func @_ln_matmul_kernel(%arg0: i32, %arg1: i32, %arg2: memref<16x32xf32, #tpu.memory_space<vmem>>, %arg3: memref<1x32xf32, #tpu.memory_space<vmem>>, %arg4: memref<1x32xf32, #tpu.memory_space<vmem>>, %arg5: memref<32x96xbf16, #tpu.memory_space<vmem>>, %arg6: memref<1x96xf32, #tpu.memory_space<vmem>>, %arg7: memref<16x96xbf16, #tpu.memory_space<vmem>>, %arg8: memref<16x32xbf16, #tpu.memory_space<vmem>>) attributes {dimension_semantics = [#tpu.dimension_semantics<parallel>, #tpu.dimension_semantics<arbitrary>], iteration_bounds = array<i64: 1, 1>, scalar_prefetch = 0 : i64, scratch_operands = 1 : i64, tpu.core_type = #tpu.core_type<tc>, window_params = [{transform_indices = @transform_0, window_bounds = array<i64: 16, 32>}, {pipeline_mode = #tpu.pipeline_mode<synchronous>, transform_indices = @transform_1, window_bounds = array<i64: 1, 32>}, {pipeline_mode = #tpu.pipeline_mode<synchronous>, transform_indices = @transform_2, window_bounds = array<i64: 1, 32>}, {transform_indices = @transform_3, window_bounds = array<i64: 32, 96>}, {transform_indices = @transform_4, window_bounds = array<i64: 1, 96>}, {transform_indices = @transform_5, window_bounds = array<i64: 16, 96>}]} {
    %c0_i32 = arith.constant 0 : i32
    %0 = arith.cmpi eq, %arg1, %c0_i32 : i32
    %1 = arith.extui %0 : i1 to i32
    %c0_i32_0 = arith.constant 0 : i32
    %2 = arith.cmpi ne, %1, %c0_i32_0 : i32
    scf.if %2 {
      %c0_8 = arith.constant 0 : index
      %c0_9 = arith.constant 0 : index
      %11 = vector.load %arg2[%c0_8, %c0_9] : memref<16x32xf32, #tpu.memory_space<vmem>>, vector<16x32xf32>
      %cst_10 = arith.constant dense<0.000000e+00> : vector<16xf32>
      %12 = vector.multi_reduction <add>, %11, %cst_10 [1] : vector<16x32xf32> to vector<16xf32>
      %13 = vector.shape_cast %12 : vector<16xf32> to vector<16x1xf32>
      %cst_11 = arith.constant 3.200000e+01 : f32
      %14 = vector.broadcast %cst_11 : f32 to vector<16x1xf32>
      %15 = arith.divf %13, %14 : vector<16x1xf32>
      %16 = vector.broadcast %15 : vector<16x1xf32> to vector<16x32xf32>
      %17 = arith.subf %11, %16 : vector<16x32xf32>
      %18 = arith.mulf %17, %17 : vector<16x32xf32>
      %cst_12 = arith.constant dense<0.000000e+00> : vector<16xf32>
      %19 = vector.multi_reduction <add>, %18, %cst_12 [1] : vector<16x32xf32> to vector<16xf32>
      %20 = vector.shape_cast %19 : vector<16xf32> to vector<16x1xf32>
      %cst_13 = arith.constant 3.200000e+01 : f32
      %21 = vector.broadcast %cst_13 : f32 to vector<16x1xf32>
      %22 = arith.divf %20, %21 : vector<16x1xf32>
      %23 = vector.broadcast %15 : vector<16x1xf32> to vector<16x32xf32>
      %24 = arith.subf %11, %23 : vector<16x32xf32>
      %cst_14 = arith.constant 9.99999974E-6 : f32
      %25 = vector.broadcast %cst_14 : f32 to vector<16x1xf32>
      %26 = arith.addf %22, %25 : vector<16x1xf32>
      %27 = math.rsqrt %26 : vector<16x1xf32>
      %28 = vector.broadcast %27 : vector<16x1xf32> to vector<16x32xf32>
      %29 = arith.mulf %24, %28 : vector<16x32xf32>
      %c0_15 = arith.constant 0 : index
      %c0_16 = arith.constant 0 : index
      %30 = vector.load %arg3[%c0_15, %c0_16] : memref<1x32xf32, #tpu.memory_space<vmem>>, vector<1x32xf32>
      %31 = vector.broadcast %30 : vector<1x32xf32> to vector<16x32xf32>
      %32 = arith.mulf %29, %31 : vector<16x32xf32>
      %c0_17 = arith.constant 0 : index
      %c0_18 = arith.constant 0 : index
      %33 = vector.load %arg4[%c0_17, %c0_18] : memref<1x32xf32, #tpu.memory_space<vmem>>, vector<1x32xf32>
      %34 = vector.broadcast %33 : vector<1x32xf32> to vector<16x32xf32>
      %35 = arith.addf %32, %34 : vector<16x32xf32>
      %36 = arith.truncf %35 : vector<16x32xf32> to vector<16x32xbf16>
      %c0_19 = arith.constant 0 : index
      %c0_20 = arith.constant 0 : index
      %37 = vector.load %arg8[%c0_19, %c0_20] : memref<16x32xbf16, #tpu.memory_space<vmem>>, vector<16x32xbf16>
      tpu.vector_store %arg8[%c0_19, %c0_20], %36 {strides = array<i32>} : memref<16x32xbf16, #tpu.memory_space<vmem>>, vector<16x32xbf16>,
    } else {
    }
    %c0 = arith.constant 0 : index
    %c0_1 = arith.constant 0 : index
    %3 = vector.load %arg8[%c0, %c0_1] : memref<16x32xbf16, #tpu.memory_space<vmem>>, vector<16x32xbf16>
    %c0_2 = arith.constant 0 : index
    %c0_3 = arith.constant 0 : index
    %4 = vector.load %arg5[%c0_2, %c0_3] : memref<32x96xbf16, #tpu.memory_space<vmem>>, vector<32x96xbf16>
    %cst = arith.constant dense<0.000000e+00> : vector<16x96xf32>
    %5 = tpu.matmul %3, %4, %cst {dimension_numbers = #tpu.dot_dimension_numbers<[1], [0], [0], [1], [0, 0, 1, 1], [], []>} : vector<16x32xbf16>, vector<32x96xbf16>, vector<16x96xf32> -> vector<16x96xf32>
    %c0_4 = arith.constant 0 : index
    %c0_5 = arith.constant 0 : index
    %6 = vector.load %arg6[%c0_4, %c0_5] : memref<1x96xf32, #tpu.memory_space<vmem>>, vector<1x96xf32>
    %7 = vector.broadcast %6 : vector<1x96xf32> to vector<16x96xf32>
    %8 = arith.addf %5, %7 : vector<16x96xf32>
    %9 = arith.truncf %8 : vector<16x96xf32> to vector<16x96xbf16>
    %c0_6 = arith.constant 0 : index
    %c0_7 = arith.constant 0 : index
    %10 = vector.load %arg7[%c0_6, %c0_7] : memref<16x96xbf16, #tpu.memory_space<vmem>>, vector<16x96xbf16>
    tpu.vector_store %arg7[%c0_6, %c0_7], %9 {strides = array<i32>} : memref<16x96xbf16, #tpu.memory_space<vmem>>, vector<16x96xbf16>,
    return
  }
  func.func @transform_0(%arg0: i32, %arg1: i32) -> (i32, i32) {
    %c0_i32 = arith.constant 0 : i32
    %c0_i32_0 = arith.constant 0 : i32
    return %arg0, %c0_i32 : i32, i32
  }
  func.func @transform_1(%arg0: i32, %arg1: i32) -> (i32, i32) {
    %c0_i32 = arith.constant 0 : i32
    %c0_i32_0 = arith.constant 0 : i32
    %c0_i32_1 = arith.constant 0 : i32
    return %c0_i32, %c0_i32_0 : i32, i32
  }
  func.func @transform_2(%arg0: i32, %arg1: i32) -> (i32, i32) {
    %c0_i32 = arith.constant 0 : i32
    %c0_i32_0 = arith.constant 0 : i32
    %c0_i32_1 = arith.constant 0 : i32
    return %c0_i32, %c0_i32_0 : i32, i32
  }
  func.func @transform_3(%arg0: i32, %arg1: i32) -> (i32, i32) {
    %c0_i32 = arith.constant 0 : i32
    %c0_i32_0 = arith.constant 0 : i32
    return %c0_i32, %arg1 : i32, i32
  }
  func.func @transform_4(%arg0: i32, %arg1: i32) -> (i32, i32) {
    %c0_i32 = arith.constant 0 : i32
    %c0_i32_0 = arith.constant 0 : i32
    return %c0_i32, %arg1 : i32, i32
  }
  func.func @transform_5(%arg0: i32, %arg1: i32) -> (i32, i32) {
    %c0_i32 = arith.constant 0 : i32
    return %arg0, %arg1 : i32, i32
  }
}

module attributes {stable_mosaic.version = 11 : i64} {
  func.func @_flash_attn_kernel(%arg0: i32, %arg1: i32, %arg2: i32, %arg3: memref<1x8x8xbf16, #tpu.memory_space<vmem>>, %arg4: memref<1x8x8xbf16, #tpu.memory_space<vmem>>, %arg5: memref<1x8x8xbf16, #tpu.memory_space<vmem>>, %arg6: memref<1x8x8xbf16, #tpu.memory_space<vmem>>, %arg7: memref<8x1xf32, #tpu.memory_space<vmem>>, %arg8: memref<8x1xf32, #tpu.memory_space<vmem>>, %arg9: memref<8x8xf32, #tpu.memory_space<vmem>>) attributes {dimension_semantics = [#tpu.dimension_semantics<parallel>, #tpu.dimension_semantics<parallel>, #tpu.dimension_semantics<arbitrary>], iteration_bounds = array<i64: 8, 1, 1>, scalar_prefetch = 0 : i64, scratch_operands = 3 : i64, tpu.core_type = #tpu.core_type<tc>, window_params = [{transform_indices = @transform_0, window_bounds = array<i64: 1, 8, 8>}, {transform_indices = @transform_1, window_bounds = array<i64: 1, 8, 8>}, {transform_indices = @transform_2, window_bounds = array<i64: 1, 8, 8>}, {transform_indices = @transform_3, window_bounds = array<i64: 1, 8, 8>}]} {
    %c0_i32 = arith.constant 0 : i32
    %0 = arith.cmpi eq, %arg2, %c0_i32 : i32
    %1 = arith.extui %0 : i1 to i32
    %c0_i32_0 = arith.constant 0 : i32
    %2 = arith.cmpi ne, %1, %c0_i32_0 : i32
    scf.if %2 {
      %cst_27 = arith.constant 0xFF800000 : f32
      %38 = vector.broadcast %cst_27 : f32 to vector<8x1xf32>
      %c0_28 = arith.constant 0 : index
      %c0_29 = arith.constant 0 : index
      %39 = vector.load %arg7[%c0_28, %c0_29] : memref<8x1xf32, #tpu.memory_space<vmem>>, vector<8x1xf32>
      tpu.vector_store %arg7[%c0_28, %c0_29], %38 {strides = array<i32>} : memref<8x1xf32, #tpu.memory_space<vmem>>, vector<8x1xf32>,
      %cst_30 = arith.constant 0.000000e+00 : f32
      %40 = vector.broadcast %cst_30 : f32 to vector<8x1xf32>
      %c0_31 = arith.constant 0 : index
      %c0_32 = arith.constant 0 : index
      %41 = vector.load %arg8[%c0_31, %c0_32] : memref<8x1xf32, #tpu.memory_space<vmem>>, vector<8x1xf32>
      tpu.vector_store %arg8[%c0_31, %c0_32], %40 {strides = array<i32>} : memref<8x1xf32, #tpu.memory_space<vmem>>, vector<8x1xf32>,
      %cst_33 = arith.constant 0.000000e+00 : f32
      %42 = vector.broadcast %cst_33 : f32 to vector<8x8xf32>
      %c0_34 = arith.constant 0 : index
      %c0_35 = arith.constant 0 : index
      %43 = vector.load %arg9[%c0_34, %c0_35] : memref<8x8xf32, #tpu.memory_space<vmem>>, vector<8x8xf32>
      tpu.vector_store %arg9[%c0_34, %c0_35], %42 {strides = array<i32>} : memref<8x8xf32, #tpu.memory_space<vmem>>, vector<8x8xf32>,
    } else {
    }
    %c0 = arith.constant 0 : index
    %c0_1 = arith.constant 0 : index
    %c0_2 = arith.constant 0 : index
    %3 = vector.load %arg3[%c0, %c0_1, %c0_2] : memref<1x8x8xbf16, #tpu.memory_space<vmem>>, vector<1x8x8xbf16>
    %4 = vector.shape_cast %3 : vector<1x8x8xbf16> to vector<8x8xbf16>
    %c0_3 = arith.constant 0 : index
    %c0_4 = arith.constant 0 : index
    %c0_5 = arith.constant 0 : index
    %5 = vector.load %arg4[%c0_3, %c0_4, %c0_5] : memref<1x8x8xbf16, #tpu.memory_space<vmem>>, vector<1x8x8xbf16>
    %6 = vector.shape_cast %5 : vector<1x8x8xbf16> to vector<8x8xbf16>
    %c0_6 = arith.constant 0 : index
    %c0_7 = arith.constant 0 : index
    %c0_8 = arith.constant 0 : index
    %7 = vector.load %arg5[%c0_6, %c0_7, %c0_8] : memref<1x8x8xbf16, #tpu.memory_space<vmem>>, vector<1x8x8xbf16>
    %8 = vector.shape_cast %7 : vector<1x8x8xbf16> to vector<8x8xbf16>
    %cst = arith.constant dense<0.000000e+00> : vector<8x8xf32>
    %9 = tpu.matmul %4, %6, %cst {dimension_numbers = #tpu.dot_dimension_numbers<[1], [1], [0], [0], [0, 0, 1, 0], [], []>} : vector<8x8xbf16>, vector<8x8xbf16>, vector<8x8xf32> -> vector<8x8xf32>
    %cst_9 = arith.constant 0.353553385 : f32
    %10 = vector.broadcast %cst_9 : f32 to vector<8x8xf32>
    %11 = arith.mulf %9, %10 : vector<8x8xf32>
    %c0_10 = arith.constant 0 : index
    %c0_11 = arith.constant 0 : index
    %12 = vector.load %arg7[%c0_10, %c0_11] : memref<8x1xf32, #tpu.memory_space<vmem>>, vector<8x1xf32>
    %cst_12 = arith.constant dense<0xFF800000> : vector<8xf32>
    %13 = vector.multi_reduction <maximumf>, %11, %cst_12 [1] : vector<8x8xf32> to vector<8xf32>
    %14 = vector.shape_cast %13 : vector<8xf32> to vector<8x1xf32>
    %15 = arith.maximumf %12, %14 : vector<8x1xf32>
    %16 = arith.subf %12, %15 : vector<8x1xf32>
    %17 = math.exp %16 : vector<8x1xf32>
    %18 = vector.broadcast %15 : vector<8x1xf32> to vector<8x8xf32>
    %19 = arith.subf %11, %18 : vector<8x8xf32>
    %20 = math.exp %19 : vector<8x8xf32>
    %c0_13 = arith.constant 0 : index
    %c0_14 = arith.constant 0 : index
    %21 = vector.load %arg8[%c0_13, %c0_14] : memref<8x1xf32, #tpu.memory_space<vmem>>, vector<8x1xf32>
    %22 = arith.mulf %17, %21 : vector<8x1xf32>
    %cst_15 = arith.constant dense<0.000000e+00> : vector<8xf32>
    %23 = vector.multi_reduction <add>, %20, %cst_15 [1] : vector<8x8xf32> to vector<8xf32>
    %24 = vector.shape_cast %23 : vector<8xf32> to vector<8x1xf32>
    %25 = arith.addf %22, %24 : vector<8x1xf32>
    %c0_16 = arith.constant 0 : index
    %c0_17 = arith.constant 0 : index
    %26 = vector.load %arg8[%c0_16, %c0_17] : memref<8x1xf32, #tpu.memory_space<vmem>>, vector<8x1xf32>
    tpu.vector_store %arg8[%c0_16, %c0_17], %25 {strides = array<i32>} : memref<8x1xf32, #tpu.memory_space<vmem>>, vector<8x1xf32>,
    %c0_18 = arith.constant 0 : index
    %c0_19 = arith.constant 0 : index
    %27 = vector.load %arg9[%c0_18, %c0_19] : memref<8x8xf32, #tpu.memory_space<vmem>>, vector<8x8xf32>
    %28 = vector.broadcast %17 : vector<8x1xf32> to vector<8x8xf32>
    %29 = arith.mulf %28, %27 : vector<8x8xf32>
    %30 = arith.truncf %20 : vector<8x8xf32> to vector<8x8xbf16>
    %cst_20 = arith.constant dense<0.000000e+00> : vector<8x8xf32>
    %31 = tpu.matmul %30, %8, %cst_20 {dimension_numbers = #tpu.dot_dimension_numbers<[1], [0], [0], [1], [0, 0, 1, 1], [], []>} : vector<8x8xbf16>, vector<8x8xbf16>, vector<8x8xf32> -> vector<8x8xf32>
    %32 = arith.addf %29, %31 : vector<8x8xf32>
    %c0_21 = arith.constant 0 : index
    %c0_22 = arith.constant 0 : index
    %33 = vector.load %arg9[%c0_21, %c0_22] : memref<8x8xf32, #tpu.memory_space<vmem>>, vector<8x8xf32>
    tpu.vector_store %arg9[%c0_21, %c0_22], %32 {strides = array<i32>} : memref<8x8xf32, #tpu.memory_space<vmem>>, vector<8x8xf32>,
    %c0_23 = arith.constant 0 : index
    %c0_24 = arith.constant 0 : index
    %34 = vector.load %arg7[%c0_23, %c0_24] : memref<8x1xf32, #tpu.memory_space<vmem>>, vector<8x1xf32>
    tpu.vector_store %arg7[%c0_23, %c0_24], %15 {strides = array<i32>} : memref<8x1xf32, #tpu.memory_space<vmem>>, vector<8x1xf32>,
    %c0_i32_25 = arith.constant 0 : i32
    %35 = arith.cmpi eq, %arg2, %c0_i32_25 : i32
    %36 = arith.extui %35 : i1 to i32
    %c0_i32_26 = arith.constant 0 : i32
    %37 = arith.cmpi ne, %36, %c0_i32_26 : i32
    scf.if %37 {
      %c0_27 = arith.constant 0 : index
      %c0_28 = arith.constant 0 : index
      %38 = vector.load %arg8[%c0_27, %c0_28] : memref<8x1xf32, #tpu.memory_space<vmem>>, vector<8x1xf32>
      %39 = tpu.reciprocal %38 {approx = true} : vector<8x1xf32> -> vector<8x1xf32>
      %c0_29 = arith.constant 0 : index
      %c0_30 = arith.constant 0 : index
      %40 = vector.load %arg9[%c0_29, %c0_30] : memref<8x8xf32, #tpu.memory_space<vmem>>, vector<8x8xf32>
      %41 = vector.broadcast %39 : vector<8x1xf32> to vector<8x8xf32>
      %42 = arith.mulf %40, %41 : vector<8x8xf32>
      %43 = arith.truncf %42 : vector<8x8xf32> to vector<8x8xbf16>
      %c0_31 = arith.constant 0 : index
      %c0_32 = arith.constant 0 : index
      %c0_33 = arith.constant 0 : index
      %44 = vector.load %arg6[%c0_31, %c0_32, %c0_33] : memref<1x8x8xbf16, #tpu.memory_space<vmem>>, vector<1x8x8xbf16>
      %45 = vector.shape_cast %44 : vector<1x8x8xbf16> to vector<8x8xbf16>
      %46 = vector.shape_cast %43 : vector<8x8xbf16> to vector<1x8x8xbf16>
      tpu.vector_store %arg6[%c0_31, %c0_32, %c0_33], %46 {strides = array<i32>} : memref<1x8x8xbf16, #tpu.memory_space<vmem>>, vector<1x8x8xbf16>,
    } else {
    }
    return
  }
  func.func @transform_0(%arg0: i32, %arg1: i32, %arg2: i32) -> (i32, i32, i32) {
    %c0_i32 = arith.constant 0 : i32
    %c0_i32_0 = arith.constant 0 : i32
    return %arg0, %arg1, %c0_i32 : i32, i32, i32
  }
  func.func @transform_1(%arg0: i32, %arg1: i32, %arg2: i32) -> (i32, i32, i32) {
    %c0_i32 = arith.constant 0 : i32
    %c0_i32_0 = arith.constant 0 : i32
    return %arg0, %arg2, %c0_i32 : i32, i32, i32
  }
  func.func @transform_2(%arg0: i32, %arg1: i32, %arg2: i32) -> (i32, i32, i32) {
    %c0_i32 = arith.constant 0 : i32
    %c0_i32_0 = arith.constant 0 : i32
    return %arg0, %arg2, %c0_i32 : i32, i32, i32
  }
  func.func @transform_3(%arg0: i32, %arg1: i32, %arg2: i32) -> (i32, i32, i32) {
    %c0_i32 = arith.constant 0 : i32
    %c0_i32_0 = arith.constant 0 : i32
    return %arg0, %arg1, %c0_i32 : i32, i32, i32
  }
}

module attributes {stable_mosaic.version = 11 : i64} {
  func.func @_matmul_res_kernel(%arg0: i32, %arg1: i32, %arg2: memref<16x32xbf16, #tpu.memory_space<vmem>>, %arg3: memref<32x32xbf16, #tpu.memory_space<vmem>>, %arg4: memref<1x32xf32, #tpu.memory_space<vmem>>, %arg5: memref<16x32xf32, #tpu.memory_space<vmem>>, %arg6: memref<16x32xf32, #tpu.memory_space<vmem>>) attributes {dimension_semantics = [#tpu.dimension_semantics<parallel>, #tpu.dimension_semantics<parallel>], iteration_bounds = array<i64: 1, 1>, scalar_prefetch = 0 : i64, scratch_operands = 0 : i64, tpu.core_type = #tpu.core_type<tc>, window_params = [{transform_indices = @transform_0, window_bounds = array<i64: 16, 32>}, {transform_indices = @transform_1, window_bounds = array<i64: 32, 32>}, {transform_indices = @transform_2, window_bounds = array<i64: 1, 32>}, {transform_indices = @transform_3, window_bounds = array<i64: 16, 32>}, {transform_indices = @transform_4, window_bounds = array<i64: 16, 32>}]} {
    %c0 = arith.constant 0 : index
    %c0_0 = arith.constant 0 : index
    %0 = vector.load %arg2[%c0, %c0_0] : memref<16x32xbf16, #tpu.memory_space<vmem>>, vector<16x32xbf16>
    %c0_1 = arith.constant 0 : index
    %c0_2 = arith.constant 0 : index
    %1 = vector.load %arg3[%c0_1, %c0_2] : memref<32x32xbf16, #tpu.memory_space<vmem>>, vector<32x32xbf16>
    %cst = arith.constant dense<0.000000e+00> : vector<16x32xf32>
    %2 = tpu.matmul %0, %1, %cst {dimension_numbers = #tpu.dot_dimension_numbers<[1], [0], [0], [1], [0, 0, 1, 1], [], []>} : vector<16x32xbf16>, vector<32x32xbf16>, vector<16x32xf32> -> vector<16x32xf32>
    %c0_3 = arith.constant 0 : index
    %c0_4 = arith.constant 0 : index
    %3 = vector.load %arg4[%c0_3, %c0_4] : memref<1x32xf32, #tpu.memory_space<vmem>>, vector<1x32xf32>
    %4 = vector.broadcast %3 : vector<1x32xf32> to vector<16x32xf32>
    %5 = arith.addf %2, %4 : vector<16x32xf32>
    %c0_5 = arith.constant 0 : index
    %c0_6 = arith.constant 0 : index
    %6 = vector.load %arg5[%c0_5, %c0_6] : memref<16x32xf32, #tpu.memory_space<vmem>>, vector<16x32xf32>
    %7 = arith.addf %5, %6 : vector<16x32xf32>
    %c0_7 = arith.constant 0 : index
    %c0_8 = arith.constant 0 : index
    %8 = vector.load %arg6[%c0_7, %c0_8] : memref<16x32xf32, #tpu.memory_space<vmem>>, vector<16x32xf32>
    tpu.vector_store %arg6[%c0_7, %c0_8], %7 {strides = array<i32>} : memref<16x32xf32, #tpu.memory_space<vmem>>, vector<16x32xf32>,
    return
  }
  func.func @transform_0(%arg0: i32, %arg1: i32) -> (i32, i32) {
    %c0_i32 = arith.constant 0 : i32
    %c0_i32_0 = arith.constant 0 : i32
    return %arg0, %c0_i32 : i32, i32
  }
  func.func @transform_1(%arg0: i32, %arg1: i32) -> (i32, i32) {
    %c0_i32 = arith.constant 0 : i32
    %c0_i32_0 = arith.constant 0 : i32
    return %c0_i32, %arg1 : i32, i32
  }
  func.func @transform_2(%arg0: i32, %arg1: i32) -> (i32, i32) {
    %c0_i32 = arith.constant 0 : i32
    %c0_i32_0 = arith.constant 0 : i32
    return %c0_i32, %arg1 : i32, i32
  }
  func.func @transform_3(%arg0: i32, %arg1: i32) -> (i32, i32) {
    %c0_i32 = arith.constant 0 : i32
    return %arg0, %arg1 : i32, i32
  }
  func.func @transform_4(%arg0: i32, %arg1: i32) -> (i32, i32) {
    %c0_i32 = arith.constant 0 : i32
    return %arg0, %arg1 : i32, i32
  }
}

module attributes {stable_mosaic.version = 11 : i64} {
  func.func @_ln_swiglu_kernel(%arg0: i32, %arg1: i32, %arg2: i32, %arg3: memref<16x32xf32, #tpu.memory_space<vmem>>, %arg4: memref<1x32xf32, #tpu.memory_space<vmem>>, %arg5: memref<1x32xf32, #tpu.memory_space<vmem>>, %arg6: memref<32x64xbf16, #tpu.memory_space<vmem>>, %arg7: memref<1x64xf32, #tpu.memory_space<vmem>>, %arg8: memref<32x64xbf16, #tpu.memory_space<vmem>>, %arg9: memref<1x64xf32, #tpu.memory_space<vmem>>, %arg10: memref<64x32xbf16, #tpu.memory_space<vmem>>, %arg11: memref<1x32xf32, #tpu.memory_space<vmem>>, %arg12: memref<16x32xf32, #tpu.memory_space<vmem>>, %arg13: memref<16x32xf32, #tpu.memory_space<vmem>>, %arg14: memref<16x32xbf16, #tpu.memory_space<vmem>>, %arg15: memref<16x32xf32, #tpu.memory_space<vmem>>) attributes {dimension_semantics = [#tpu.dimension_semantics<parallel>, #tpu.dimension_semantics<parallel>, #tpu.dimension_semantics<arbitrary>], iteration_bounds = array<i64: 1, 1, 1>, scalar_prefetch = 0 : i64, scratch_operands = 2 : i64, tpu.core_type = #tpu.core_type<tc>, window_params = [{transform_indices = @transform_0, window_bounds = array<i64: 16, 32>}, {pipeline_mode = #tpu.pipeline_mode<synchronous>, transform_indices = @transform_1, window_bounds = array<i64: 1, 32>}, {pipeline_mode = #tpu.pipeline_mode<synchronous>, transform_indices = @transform_2, window_bounds = array<i64: 1, 32>}, {transform_indices = @transform_3, window_bounds = array<i64: 32, 64>}, {transform_indices = @transform_4, window_bounds = array<i64: 1, 64>}, {transform_indices = @transform_5, window_bounds = array<i64: 32, 64>}, {transform_indices = @transform_6, window_bounds = array<i64: 1, 64>}, {transform_indices = @transform_7, window_bounds = array<i64: 64, 32>}, {transform_indices = @transform_8, window_bounds = array<i64: 1, 32>}, {transform_indices = @transform_9, window_bounds = array<i64: 16, 32>}, {transform_indices = @transform_10, window_bounds = array<i64: 16, 32>}]} {
    %c0_i32 = arith.constant 0 : i32
    %0 = arith.cmpi eq, %arg2, %c0_i32 : i32
    %1 = arith.extui %0 : i1 to i32
    %c0_i32_0 = arith.constant 0 : i32
    %2 = arith.cmpi ne, %1, %c0_i32_0 : i32
    scf.if %2 {
      %c0_21 = arith.constant 0 : index
      %c0_22 = arith.constant 0 : index
      %30 = vector.load %arg3[%c0_21, %c0_22] : memref<16x32xf32, #tpu.memory_space<vmem>>, vector<16x32xf32>
      %cst_23 = arith.constant dense<0.000000e+00> : vector<16xf32>
      %31 = vector.multi_reduction <add>, %30, %cst_23 [1] : vector<16x32xf32> to vector<16xf32>
      %32 = vector.shape_cast %31 : vector<16xf32> to vector<16x1xf32>
      %cst_24 = arith.constant 3.200000e+01 : f32
      %33 = vector.broadcast %cst_24 : f32 to vector<16x1xf32>
      %34 = arith.divf %32, %33 : vector<16x1xf32>
      %35 = vector.broadcast %34 : vector<16x1xf32> to vector<16x32xf32>
      %36 = arith.subf %30, %35 : vector<16x32xf32>
      %37 = arith.mulf %36, %36 : vector<16x32xf32>
      %cst_25 = arith.constant dense<0.000000e+00> : vector<16xf32>
      %38 = vector.multi_reduction <add>, %37, %cst_25 [1] : vector<16x32xf32> to vector<16xf32>
      %39 = vector.shape_cast %38 : vector<16xf32> to vector<16x1xf32>
      %cst_26 = arith.constant 3.200000e+01 : f32
      %40 = vector.broadcast %cst_26 : f32 to vector<16x1xf32>
      %41 = arith.divf %39, %40 : vector<16x1xf32>
      %42 = vector.broadcast %34 : vector<16x1xf32> to vector<16x32xf32>
      %43 = arith.subf %30, %42 : vector<16x32xf32>
      %cst_27 = arith.constant 9.99999974E-6 : f32
      %44 = vector.broadcast %cst_27 : f32 to vector<16x1xf32>
      %45 = arith.addf %41, %44 : vector<16x1xf32>
      %46 = math.rsqrt %45 : vector<16x1xf32>
      %47 = vector.broadcast %46 : vector<16x1xf32> to vector<16x32xf32>
      %48 = arith.mulf %43, %47 : vector<16x32xf32>
      %c0_28 = arith.constant 0 : index
      %c0_29 = arith.constant 0 : index
      %49 = vector.load %arg4[%c0_28, %c0_29] : memref<1x32xf32, #tpu.memory_space<vmem>>, vector<1x32xf32>
      %50 = vector.broadcast %49 : vector<1x32xf32> to vector<16x32xf32>
      %51 = arith.mulf %48, %50 : vector<16x32xf32>
      %c0_30 = arith.constant 0 : index
      %c0_31 = arith.constant 0 : index
      %52 = vector.load %arg5[%c0_30, %c0_31] : memref<1x32xf32, #tpu.memory_space<vmem>>, vector<1x32xf32>
      %53 = vector.broadcast %52 : vector<1x32xf32> to vector<16x32xf32>
      %54 = arith.addf %51, %53 : vector<16x32xf32>
      %55 = arith.truncf %54 : vector<16x32xf32> to vector<16x32xbf16>
      %c0_32 = arith.constant 0 : index
      %c0_33 = arith.constant 0 : index
      %56 = vector.load %arg14[%c0_32, %c0_33] : memref<16x32xbf16, #tpu.memory_space<vmem>>, vector<16x32xbf16>
      tpu.vector_store %arg14[%c0_32, %c0_33], %55 {strides = array<i32>} : memref<16x32xbf16, #tpu.memory_space<vmem>>, vector<16x32xbf16>,
      %cst_34 = arith.constant 0.000000e+00 : f32
      %57 = vector.broadcast %cst_34 : f32 to vector<16x32xf32>
      %c0_35 = arith.constant 0 : index
      %c0_36 = arith.constant 0 : index
      %58 = vector.load %arg15[%c0_35, %c0_36] : memref<16x32xf32, #tpu.memory_space<vmem>>, vector<16x32xf32>
      tpu.vector_store %arg15[%c0_35, %c0_36], %57 {strides = array<i32>} : memref<16x32xf32, #tpu.memory_space<vmem>>, vector<16x32xf32>,
    } else {
    }
    %c0 = arith.constant 0 : index
    %c0_1 = arith.constant 0 : index
    %3 = vector.load %arg14[%c0, %c0_1] : memref<16x32xbf16, #tpu.memory_space<vmem>>, vector<16x32xbf16>
    %c0_2 = arith.constant 0 : index
    %c0_3 = arith.constant 0 : index
    %4 = vector.load %arg6[%c0_2, %c0_3] : memref<32x64xbf16, #tpu.memory_space<vmem>>, vector<32x64xbf16>
    %cst = arith.constant dense<0.000000e+00> : vector<16x64xf32>
    %5 = tpu.matmul %3, %4, %cst {dimension_numbers = #tpu.dot_dimension_numbers<[1], [0], [0], [1], [0, 0, 1, 1], [], []>} : vector<16x32xbf16>, vector<32x64xbf16>, vector<16x64xf32> -> vector<16x64xf32>
    %c0_4 = arith.constant 0 : index
    %c0_5 = arith.constant 0 : index
    %6 = vector.load %arg7[%c0_4, %c0_5] : memref<1x64xf32, #tpu.memory_space<vmem>>, vector<1x64xf32>
    %7 = vector.broadcast %6 : vector<1x64xf32> to vector<16x64xf32>
    %8 = arith.addf %5, %7 : vector<16x64xf32>
    %c0_6 = arith.constant 0 : index
    %c0_7 = arith.constant 0 : index
    %9 = vector.load %arg8[%c0_6, %c0_7] : memref<32x64xbf16, #tpu.memory_space<vmem>>, vector<32x64xbf16>
    %cst_8 = arith.constant dense<0.000000e+00> : vector<16x64xf32>
    %10 = tpu.matmul %3, %9, %cst_8 {dimension_numbers = #tpu.dot_dimension_numbers<[1], [0], [0], [1], [0, 0, 1, 1], [], []>} : vector<16x32xbf16>, vector<32x64xbf16>, vector<16x64xf32> -> vector<16x64xf32>
    %c0_9 = arith.constant 0 : index
    %c0_10 = arith.constant 0 : index
    %11 = vector.load %arg9[%c0_9, %c0_10] : memref<1x64xf32, #tpu.memory_space<vmem>>, vector<1x64xf32>
    %12 = vector.broadcast %11 : vector<1x64xf32> to vector<16x64xf32>
    %13 = arith.addf %10, %12 : vector<16x64xf32>
    %14 = arith.negf %8 : vector<16x64xf32>
    %15 = math.exp %14 : vector<16x64xf32>
    %cst_11 = arith.constant 1.000000e+00 : f32
    %16 = vector.broadcast %cst_11 : f32 to vector<16x64xf32>
    %17 = arith.addf %16, %15 : vector<16x64xf32>
    %18 = arith.divf %16, %17 : vector<16x64xf32>
    %19 = arith.mulf %8, %18 : vector<16x64xf32>
    %20 = arith.mulf %19, %13 : vector<16x64xf32>
    %c0_12 = arith.constant 0 : index
    %c0_13 = arith.constant 0 : index
    %21 = vector.load %arg15[%c0_12, %c0_13] : memref<16x32xf32, #tpu.memory_space<vmem>>, vector<16x32xf32>
    %22 = arith.truncf %20 : vector<16x64xf32> to vector<16x64xbf16>
    %c0_14 = arith.constant 0 : index
    %c0_15 = arith.constant 0 : index
    %23 = vector.load %arg10[%c0_14, %c0_15] : memref<64x32xbf16, #tpu.memory_space<vmem>>, vector<64x32xbf16>
    %cst_16 = arith.constant dense<0.000000e+00> : vector<16x32xf32>
    %24 = tpu.matmul %22, %23, %cst_16 {dimension_numbers = #tpu.dot_dimension_numbers<[1], [0], [0], [1], [0, 0, 1, 1], [], []>} : vector<16x64xbf16>, vector<64x32xbf16>, vector<16x32xf32> -> vector<16x32xf32>
    %25 = arith.addf %21, %24 : vector<16x32xf32>
    %c0_17 = arith.constant 0 : index
    %c0_18 = arith.constant 0 : index
    %26 = vector.load %arg15[%c0_17, %c0_18] : memref<16x32xf32, #tpu.memory_space<vmem>>, vector<16x32xf32>
    tpu.vector_store %arg15[%c0_17, %c0_18], %25 {strides = array<i32>} : memref<16x32xf32, #tpu.memory_space<vmem>>, vector<16x32xf32>,
    %c0_i32_19 = arith.constant 0 : i32
    %27 = arith.cmpi eq, %arg2, %c0_i32_19 : i32
    %28 = arith.extui %27 : i1 to i32
    %c0_i32_20 = arith.constant 0 : i32
    %29 = arith.cmpi ne, %28, %c0_i32_20 : i32
    scf.if %29 {
      %c0_21 = arith.constant 0 : index
      %c0_22 = arith.constant 0 : index
      %30 = vector.load %arg15[%c0_21, %c0_22] : memref<16x32xf32, #tpu.memory_space<vmem>>, vector<16x32xf32>
      %c0_23 = arith.constant 0 : index
      %c0_24 = arith.constant 0 : index
      %31 = vector.load %arg11[%c0_23, %c0_24] : memref<1x32xf32, #tpu.memory_space<vmem>>, vector<1x32xf32>
      %32 = vector.broadcast %31 : vector<1x32xf32> to vector<16x32xf32>
      %33 = arith.addf %30, %32 : vector<16x32xf32>
      %c0_25 = arith.constant 0 : index
      %c0_26 = arith.constant 0 : index
      %34 = vector.load %arg12[%c0_25, %c0_26] : memref<16x32xf32, #tpu.memory_space<vmem>>, vector<16x32xf32>
      %35 = arith.addf %33, %34 : vector<16x32xf32>
      %c0_27 = arith.constant 0 : index
      %c0_28 = arith.constant 0 : index
      %36 = vector.load %arg13[%c0_27, %c0_28] : memref<16x32xf32, #tpu.memory_space<vmem>>, vector<16x32xf32>
      tpu.vector_store %arg13[%c0_27, %c0_28], %35 {strides = array<i32>} : memref<16x32xf32, #tpu.memory_space<vmem>>, vector<16x32xf32>,
    } else {
    }
    return
  }
  func.func @transform_0(%arg0: i32, %arg1: i32, %arg2: i32) -> (i32, i32) {
    %c0_i32 = arith.constant 0 : i32
    %c0_i32_0 = arith.constant 0 : i32
    return %arg0, %c0_i32 : i32, i32
  }
  func.func @transform_1(%arg0: i32, %arg1: i32, %arg2: i32) -> (i32, i32) {
    %c0_i32 = arith.constant 0 : i32
    %c0_i32_0 = arith.constant 0 : i32
    %c0_i32_1 = arith.constant 0 : i32
    return %c0_i32, %c0_i32_0 : i32, i32
  }
  func.func @transform_2(%arg0: i32, %arg1: i32, %arg2: i32) -> (i32, i32) {
    %c0_i32 = arith.constant 0 : i32
    %c0_i32_0 = arith.constant 0 : i32
    %c0_i32_1 = arith.constant 0 : i32
    return %c0_i32, %c0_i32_0 : i32, i32
  }
  func.func @transform_3(%arg0: i32, %arg1: i32, %arg2: i32) -> (i32, i32) {
    %c0_i32 = arith.constant 0 : i32
    %c0_i32_0 = arith.constant 0 : i32
    return %c0_i32, %arg2 : i32, i32
  }
  func.func @transform_4(%arg0: i32, %arg1: i32, %arg2: i32) -> (i32, i32) {
    %c0_i32 = arith.constant 0 : i32
    %c0_i32_0 = arith.constant 0 : i32
    return %c0_i32, %arg2 : i32, i32
  }
  func.func @transform_5(%arg0: i32, %arg1: i32, %arg2: i32) -> (i32, i32) {
    %c0_i32 = arith.constant 0 : i32
    %c0_i32_0 = arith.constant 0 : i32
    return %c0_i32, %arg2 : i32, i32
  }
  func.func @transform_6(%arg0: i32, %arg1: i32, %arg2: i32) -> (i32, i32) {
    %c0_i32 = arith.constant 0 : i32
    %c0_i32_0 = arith.constant 0 : i32
    return %c0_i32, %arg2 : i32, i32
  }
  func.func @transform_7(%arg0: i32, %arg1: i32, %arg2: i32) -> (i32, i32) {
    %c0_i32 = arith.constant 0 : i32
    return %arg2, %arg1 : i32, i32
  }
  func.func @transform_8(%arg0: i32, %arg1: i32, %arg2: i32) -> (i32, i32) {
    %c0_i32 = arith.constant 0 : i32
    %c0_i32_0 = arith.constant 0 : i32
    return %c0_i32, %arg1 : i32, i32
  }
  func.func @transform_9(%arg0: i32, %arg1: i32, %arg2: i32) -> (i32, i32) {
    %c0_i32 = arith.constant 0 : i32
    return %arg0, %arg1 : i32, i32
  }
  func.func @transform_10(%arg0: i32, %arg1: i32, %arg2: i32) -> (i32, i32) {
    %c0_i32 = arith.constant 0 : i32
    return %arg0, %arg1 : i32, i32
  }
}

module attributes {stable_mosaic.version = 11 : i64} {
  func.func @_layernorm_kernel(%arg0: i32, %arg1: memref<16x32xf32, #tpu.memory_space<vmem>>, %arg2: memref<1x32xf32, #tpu.memory_space<vmem>>, %arg3: memref<1x32xf32, #tpu.memory_space<vmem>>, %arg4: memref<16x32xf32, #tpu.memory_space<vmem>>) attributes {dimension_semantics = [#tpu.dimension_semantics<parallel>], iteration_bounds = array<i64: 1>, scalar_prefetch = 0 : i64, scratch_operands = 0 : i64, tpu.core_type = #tpu.core_type<tc>, window_params = [{transform_indices = @transform_0, window_bounds = array<i64: 16, 32>}, {pipeline_mode = #tpu.pipeline_mode<synchronous>, transform_indices = @transform_1, window_bounds = array<i64: 1, 32>}, {pipeline_mode = #tpu.pipeline_mode<synchronous>, transform_indices = @transform_2, window_bounds = array<i64: 1, 32>}, {transform_indices = @transform_3, window_bounds = array<i64: 16, 32>}]} {
    %c0 = arith.constant 0 : index
    %c0_0 = arith.constant 0 : index
    %0 = vector.load %arg1[%c0, %c0_0] : memref<16x32xf32, #tpu.memory_space<vmem>>, vector<16x32xf32>
    %cst = arith.constant dense<0.000000e+00> : vector<16xf32>
    %1 = vector.multi_reduction <add>, %0, %cst [1] : vector<16x32xf32> to vector<16xf32>
    %2 = vector.shape_cast %1 : vector<16xf32> to vector<16x1xf32>
    %cst_1 = arith.constant 3.200000e+01 : f32
    %3 = vector.broadcast %cst_1 : f32 to vector<16x1xf32>
    %4 = arith.divf %2, %3 : vector<16x1xf32>
    %5 = vector.broadcast %4 : vector<16x1xf32> to vector<16x32xf32>
    %6 = arith.subf %0, %5 : vector<16x32xf32>
    %7 = arith.mulf %6, %6 : vector<16x32xf32>
    %cst_2 = arith.constant dense<0.000000e+00> : vector<16xf32>
    %8 = vector.multi_reduction <add>, %7, %cst_2 [1] : vector<16x32xf32> to vector<16xf32>
    %9 = vector.shape_cast %8 : vector<16xf32> to vector<16x1xf32>
    %cst_3 = arith.constant 3.200000e+01 : f32
    %10 = vector.broadcast %cst_3 : f32 to vector<16x1xf32>
    %11 = arith.divf %9, %10 : vector<16x1xf32>
    %12 = vector.broadcast %4 : vector<16x1xf32> to vector<16x32xf32>
    %13 = arith.subf %0, %12 : vector<16x32xf32>
    %cst_4 = arith.constant 9.99999974E-6 : f32
    %14 = vector.broadcast %cst_4 : f32 to vector<16x1xf32>
    %15 = arith.addf %11, %14 : vector<16x1xf32>
    %16 = math.rsqrt %15 : vector<16x1xf32>
    %17 = vector.broadcast %16 : vector<16x1xf32> to vector<16x32xf32>
    %18 = arith.mulf %13, %17 : vector<16x32xf32>
    %c0_5 = arith.constant 0 : index
    %c0_6 = arith.constant 0 : index
    %19 = vector.load %arg2[%c0_5, %c0_6] : memref<1x32xf32, #tpu.memory_space<vmem>>, vector<1x32xf32>
    %20 = vector.broadcast %19 : vector<1x32xf32> to vector<16x32xf32>
    %21 = arith.mulf %18, %20 : vector<16x32xf32>
    %c0_7 = arith.constant 0 : index
    %c0_8 = arith.constant 0 : index
    %22 = vector.load %arg3[%c0_7, %c0_8] : memref<1x32xf32, #tpu.memory_space<vmem>>, vector<1x32xf32>
    %23 = vector.broadcast %22 : vector<1x32xf32> to vector<16x32xf32>
    %24 = arith.addf %21, %23 : vector<16x32xf32>
    %c0_9 = arith.constant 0 : index
    %c0_10 = arith.constant 0 : index
    %25 = vector.load %arg4[%c0_9, %c0_10] : memref<16x32xf32, #tpu.memory_space<vmem>>, vector<16x32xf32>
    tpu.vector_store %arg4[%c0_9, %c0_10], %24 {strides = array<i32>} : memref<16x32xf32, #tpu.memory_space<vmem>>, vector<16x32xf32>,
    return
  }
  func.func @transform_0(%arg0: i32) -> (i32, i32) {
    %c0_i32 = arith.constant 0 : i32
    %c0_i32_0 = arith.constant 0 : i32
    return %arg0, %c0_i32 : i32, i32
  }
  func.func @transform_1(%arg0: i32) -> (i32, i32) {
    %c0_i32 = arith.constant 0 : i32
    %c0_i32_0 = arith.constant 0 : i32
    %c0_i32_1 = arith.constant 0 : i32
    return %c0_i32, %c0_i32_0 : i32, i32
  }
  func.func @transform_2(%arg0: i32) -> (i32, i32) {
    %c0_i32 = arith.constant 0 : i32
    %c0_i32_0 = arith.constant 0 : i32
    %c0_i32_1 = arith.constant 0 : i32
    return %c0_i32, %c0_i32_0 : i32, i32
  }
  func.func @transform_3(%arg0: i32) -> (i32, i32) {
    %c0_i32 = arith.constant 0 : i32
    %c0_i32_0 = arith.constant 0 : i32
    return %arg0, %c0_i32 : i32, i32
  }
}

</mosaic_0001>

<llo_original>
// kernel: transformer_encoder.10
$region0: #{transformer_encoder.10}
  #allocation0 [shape = 'u32[]', space=smem, size = 0x4, offset = 0x4, fixed_abs, tag = 'smem constant byte address 0x4 - core index']
  #allocation1 [shape = 'u32[72,128]{1,0:T(1,128)}', space=vmem, size = 0x9000, scoped, tag = 'internal scratch']
  %s0 = inlined_call_operand.vmem [shape: f32[2,8,16], index: 0, kind: input, shape index: {}]
  %s1 = inlined_call_operand.vmem [shape: bf16[16,32], index: 1, kind: input, shape index: {}]
  %s2 = inlined_call_operand.vmem [shape: f32[1,32], index: 2, kind: input, shape index: {}]
  %s3 = inlined_call_operand.vmem [shape: f32[8,32], index: 3, kind: input, shape index: {}]
  %s4 = inlined_call_operand.vmem [shape: f32[2,8,32], index: 4, kind: output, shape index: {}]
  %s5 = sld [smem:[#allocation0]]
  $region49: #{transformer_encoder.10} parent=0
    _
  %s7 = ssub.s32 1, %s5
  %s8 = scalar_select 0, %s7, %s5
  loop: start=0, step=1, limit=4
  $region2: #{transformer_encoder.10} parent=0 // loop_pre_header
    _
  $region3: #{transformer_encoder.10} parent=0 // loop_header
    %s10 = sphi 0, %s14
    %p11 = scmp.ge.s32.totalorder %s10, 4
    %s17 = sphi 0, %s29
    %s18 = sphi 0, %s25
    %s19 = sphi 0, %s17
    %s20 = sphi 0, %s18
    %s21 = sphi 0, %s19
    %s22 = sphi 0, %s20
    %s32 = sphi 0, %s34
    %s35 = sphi 0, %s32
    %s36 = sphi 0, %s35
    %s52 = sphi 0, %s36
    %s58 = sphi 0, %s60
    %s61 = sphi 0, %s58
    %s62 = sphi 0, %s61
    %s78 = sphi 0, %s62
    %s84 = sphi 0, %s86
    %s87 = sphi 0, %s84
    %s88 = sphi 0, %s87
    %s104 = sphi 0, %s88
    %s110 = sphi 0, %s112
    %s113 = sphi 0, %s110
    %s114 = sphi 0, %s113
    %s130 = sphi 0, %s114
    %s138 = sphi 0, %s140
    %s141 = sphi 0, %s138
    %s142 = sphi 0, %s141
    %s158 = sphi 0, %s142
  $region4: #{transformer_encoder.10} parent=0 // loop_header_branch
    %13 = sbr.rel (%p11) target = $region8
  $region5: #{transformer_encoder.10} parent=0 // loop_body
    %s15 = ssub.s32 %s10, 1
    %s16 = ssub.s32 %s10, 2
    %s23 = sadd.s32 1, %s18
    %p24 = scmp.ge.s32.totalorder %s23, 1
    %s25 = scalar_select %p24, 0, %s23
    %s26 = sadd.s32 1, %s17
    %s27 = scalar_select %p24, %s26, %s17
    %p28 = scmp.ge.s32.totalorder %s27, 2
    %s29 = scalar_select %p28, 0, %s27
    %s30 = ssub.s32 %s17, %s29
    %p31 = scmp.eq.s32.totalorder %s30, 0
    %s33 = sadd.s32 %s32, 1
    %s34 = scalar_select %p31, %s32, %s33
    %p37 = pneg %p31
    %p38 = scmp.eq.s32.totalorder %s10, 1
    %p39 = por %p37, %p38
    %p40 = scmp.ne.s32.totalorder %s32, %s35
    %p41 = scmp.eq.s32.totalorder %s10, 0
    %p42 = por %p40, %p41
    %p43 = scmp.ne.s32.totalorder %s32, %s35
    %p44 = scmp.eq.s32.totalorder %s15, 1
    %p45 = por %p43, %p44
    %p46 = scmp.ne.s32.totalorder %s35, %s36
    %p47 = scmp.eq.s32.totalorder %s15, 0
    %p48 = por %p46, %p47
    %p49 = scmp.ne.s32.totalorder %s35, %s36
    %p50 = scmp.eq.s32.totalorder %s16, 1
    %p51 = por %p49, %p50
    %p53 = scmp.ne.s32.totalorder %s36, %s52
    %p54 = scmp.eq.s32.totalorder %s16, 0
    %p55 = por %p53, %p54
    %s56 = ssub.s32 %s18, %s25
    %p57 = scmp.eq.s32.totalorder %s56, 0
    %s59 = sadd.s32 %s58, 1
    %s60 = scalar_select %p57, %s58, %s59
    %p63 = pneg %p57
    %p64 = scmp.eq.s32.totalorder %s10, 1
    %p65 = por %p63, %p64
    %p66 = scmp.ne.s32.totalorder %s58, %s61
    %p67 = scmp.eq.s32.totalorder %s10, 0
    %p68 = por %p66, %p67
    %p69 = scmp.ne.s32.totalorder %s58, %s61
    %p70 = scmp.eq.s32.totalorder %s15, 1
    %p71 = por %p69, %p70
    %p72 = scmp.ne.s32.totalorder %s61, %s62
    %p73 = scmp.eq.s32.totalorder %s15, 0
    %p74 = por %p72, %p73
    %p75 = scmp.ne.s32.totalorder %s61, %s62
    %p76 = scmp.eq.s32.totalorder %s16, 1
    %p77 = por %p75, %p76
    %p79 = scmp.ne.s32.totalorder %s62, %s78
    %p80 = scmp.eq.s32.totalorder %s16, 0
    %p81 = por %p79, %p80
    %s82 = ssub.s32 %s18, %s25
    %p83 = scmp.eq.s32.totalorder %s82, 0
    %s85 = sadd.s32 %s84, 1
    %s86 = scalar_select %p83, %s84, %s85
    %p89 = pneg %p83
    %p90 = scmp.eq.s32.totalorder %s10, 1
    %p91 = por %p89, %p90
    %p92 = scmp.ne.s32.totalorder %s84, %s87
    %p93 = scmp.eq.s32.totalorder %s10, 0
    %p94 = por %p92, %p93
    %p95 = scmp.ne.s32.totalorder %s84, %s87
    %p96 = scmp.eq.s32.totalorder %s15, 1
    %p97 = por %p95, %p96
    %p98 = scmp.ne.s32.totalorder %s87, %s88
    %p99 = scmp.eq.s32.totalorder %s15, 0
    %p100 = por %p98, %p99
    %p101 = scmp.ne.s32.totalorder %s87, %s88
    %p102 = scmp.eq.s32.totalorder %s16, 1
    %p103 = por %p101, %p102
    %p105 = scmp.ne.s32.totalorder %s88, %s104
    %p106 = scmp.eq.s32.totalorder %s16, 0
    %p107 = por %p105, %p106
    %s108 = ssub.s32 %s18, %s25
    %p109 = scmp.eq.s32.totalorder %s108, 0
    %s111 = sadd.s32 %s110, 1
    %s112 = scalar_select %p109, %s110, %s111
    %p115 = pneg %p109
    %p116 = scmp.eq.s32.totalorder %s10, 1
    %p117 = por %p115, %p116
    %p118 = scmp.ne.s32.totalorder %s110, %s113
    %p119 = scmp.eq.s32.totalorder %s10, 0
    %p120 = por %p118, %p119
    %p121 = scmp.ne.s32.totalorder %s110, %s113
    %p122 = scmp.eq.s32.totalorder %s15, 1
    %p123 = por %p121, %p122
    %p124 = scmp.ne.s32.totalorder %s113, %s114
    %p125 = scmp.eq.s32.totalorder %s15, 0
    %p126 = por %p124, %p125
    %p127 = scmp.ne.s32.totalorder %s113, %s114
    %p128 = scmp.eq.s32.totalorder %s16, 1
    %p129 = por %p127, %p128
    %p131 = scmp.ne.s32.totalorder %s114, %s130
    %p132 = scmp.eq.s32.totalorder %s16, 0
    %p133 = por %p131, %p132
    %s134 = ssub.s32 %s17, %s29
    %s135 = ssub.s32 %s18, %s25
    %s136 = sor.u32 %s134, %s135
    %p137 = scmp.eq.s32.totalorder %s136, 0
    %s139 = sadd.s32 %s138, 1
    %s140 = scalar_select %p137, %s138, %s139
    %p143 = pneg %p137
    %p144 = scmp.eq.s32.totalorder %s10, 1
    %p145 = por %p143, %p144
    %p146 = scmp.ne.s32.totalorder %s138, %s141
    %p147 = scmp.eq.s32.totalorder %s10, 0
    %p148 = por %p146, %p147
    %p149 = scmp.ne.s32.totalorder %s138, %s141
    %p150 = scmp.eq.s32.totalorder %s15, 1
    %p151 = por %p149, %p150
    %p152 = scmp.ne.s32.totalorder %s141, %s142
    %p153 = scmp.eq.s32.totalorder %s15, 0
    %p154 = por %p152, %p153
    %p155 = scmp.ne.s32.totalorder %s141, %s142
    %p156 = scmp.eq.s32.totalorder %s16, 1
    %p157 = por %p155, %p156
    %p159 = scmp.ne.s32.totalorder %s142, %s158
    %p160 = scmp.eq.s32.totalorder %s16, 0
    %p161 = por %p159, %p160
    %p162 = scmp.le.s32.totalorder 1, %s10
    %p163 = scmp.lt.s32.totalorder %s10, 3
    %p164 = pnand %p162, %p163
    %p165 = pneg %p164
    // Predicated region
    $region9: #{transformer_encoder.10} parent=5 // pred_check
      _
    $region10: #{transformer_encoder.10} parent=5 // pred_check_branch
      %167 = sbr.rel (%p164) target = $region12
    $region11: #{transformer_encoder.10} parent=5 // pred_region
      %s168 = ssub.s32 %s10, 1
      // Predicated region
      $region13: #{transformer_encoder.10} parent=11 // pred_check
        %p169 = pneg %p74
      $region14: #{transformer_encoder.10} parent=11 // pred_check_branch
        %171 = sbr.rel (%p169) target = $region16
      $region15: #{transformer_encoder.10} parent=11 // pred_region
        %p172 = scmp.lt.s32.totalorder %s20, 0
        %s173 = scalar_select %p172, %s20, 0
        %s174 = smul.addr %s173, 4
        %s175 = scalar_lea.vmem %s1, %s174
      $region16: #{transformer_encoder.10} parent=11 // pred_fallthru
        _
      // Predicated region
      $region17: #{transformer_encoder.10} parent=11 // pred_check
        %p176 = pneg %p100
      $region18: #{transformer_encoder.10} parent=11 // pred_check_branch
        %178 = sbr.rel (%p176) target = $region20
      $region19: #{transformer_encoder.10} parent=11 // pred_region
        %p179 = scmp.lt.s32.totalorder %s20, 0
        %s180 = scalar_select %p179, %s20, 0
        %s181 = scalar_lea.vmem %s2, %s180
      $region20: #{transformer_encoder.10} parent=11 // pred_fallthru
        _
      // Predicated region
      $region21: #{transformer_encoder.10} parent=11 // pred_check
        %p182 = pneg %p126
      $region22: #{transformer_encoder.10} parent=11 // pred_check_branch
        %184 = sbr.rel (%p182) target = $region24
      $region23: #{transformer_encoder.10} parent=11 // pred_region
        %p185 = scmp.lt.s32.totalorder %s20, 0
        %s186 = scalar_select %p185, %s20, 0
        %s187 = smul.addr %s186, 8
        %s188 = scalar_lea.vmem %s3, %s187
      $region24: #{transformer_encoder.10} parent=11 // pred_fallthru
        _
    $region12: #{transformer_encoder.10} parent=5 // pred_fallthru
      _
    %p189 = scmp.lt.s32.totalorder %s10, 2
    // Predicated region
    $region25: #{transformer_encoder.10} parent=5 // pred_check
      %p190 = pneg %p189
    $region26: #{transformer_encoder.10} parent=5 // pred_check_branch
      %192 = sbr.rel (%p190) target = $region28
    $region27: #{transformer_encoder.10} parent=5 // pred_region
      // Predicated region
      $region29: #{transformer_encoder.10} parent=27 // pred_check
        %p193 = pneg %p42
      $region30: #{transformer_encoder.10} parent=27 // pred_check_branch
        %195 = sbr.rel (%p193) target = $region32
      $region31: #{transformer_encoder.10} parent=27 // pred_region
        %p196 = scmp.lt.s32.totalorder %s17, 1
        %s197 = scalar_select %p196, %s17, 1
        %s198 = smul.addr %s197, 8
        %s199 = scalar_lea.vmem %s0, %s198
      $region32: #{transformer_encoder.10} parent=27 // pred_fallthru
        _
    $region28: #{transformer_encoder.10} parent=5 // pred_fallthru
      _
    %p200 = scmp.le.s32.totalorder 1, %s10
    %p201 = scmp.lt.s32.totalorder %s10, 3
    %p202 = pnand %p200, %p201
    %p203 = pneg %p202
    // Predicated region
    $region33: #{transformer_encoder.10} parent=5 // pred_check
      _
    $region34: #{transformer_encoder.10} parent=5 // pred_check_branch
      %205 = sbr.rel (%p202) target = $region36
    $region35: #{transformer_encoder.10} parent=5 // pred_region
      %s206 = ssub.s32 %s10, 1
      %p207 = scmp.lt.s32.totalorder %s19, 1
      %s208 = scalar_select %p207, %s19, 1
      %s209 = smul.addr %s208, 8
      %s210 = scalar_lea.vmem %s0, %s209
      %p211 = pneg %p48
      %p212 = pneg %p45
      %p213 = scmp.lt.s32.totalorder %s20, 0
      %s214 = scalar_select %p213, %s20, 0
      %s215 = smul.addr %s214, 4
      %s216 = scalar_lea.vmem %s1, %s215
      %p217 = pneg %p74
      %p218 = pneg %p71
      %p219 = scmp.lt.s32.totalorder %s20, 0
      %s220 = scalar_select %p219, %s20, 0
      %s221 = scalar_lea.vmem %s2, %s220
      %p222 = pneg %p100
      %p223 = pneg %p97
      %p224 = scmp.lt.s32.totalorder %s20, 0
      %s225 = scalar_select %p224, %s20, 0
      %s226 = smul.addr %s225, 8
      %s227 = scalar_lea.vmem %s3, %s226
      %p228 = pneg %p126
      %p229 = pneg %p123
      %p230 = pneg %p154
      %p231 = pneg %p151
      %p232 = scmp.lt.s32.totalorder %s19, 1
      %s233 = scalar_select %p232, %s19, 1
      %p234 = scmp.lt.s32.totalorder %s20, 0
      %s235 = scalar_select %p234, %s20, 0
      %s236 = sadd.s32 %s235, %s233
      %s237 = smul.addr %s236, 8
      %s238 = scalar_lea.vmem %s4, %s237
      %p239 = scmp.lt.s32.totalorder %s19, 1
      %s240 = scalar_select %p239, %s19, 1
      %s241 = smul.addr %s240, 8
      %s242 = scalar_lea.vmem %s0, %s241
      %p243 = scmp.lt.s32.totalorder %s20, 0
      %s244 = scalar_select %p243, %s20, 0
      %s245 = smul.addr %s244, 4
      %s246 = scalar_lea.vmem %s1, %s245
      %p247 = scmp.lt.s32.totalorder %s20, 0
      %s248 = scalar_select %p247, %s20, 0
      %s249 = scalar_lea.vmem %s2, %s248
      %p250 = scmp.lt.s32.totalorder %s20, 0
      %s251 = scalar_select %p250, %s20, 0
      %s252 = smul.addr %s251, 8
      %s253 = scalar_lea.vmem %s3, %s252
      %p254 = scmp.lt.s32.totalorder %s19, 1
      %s255 = scalar_select %p254, %s19, 1
      %p256 = scmp.lt.s32.totalorder %s20, 0
      %s257 = scalar_select %p256, %s20, 0
      %s258 = sadd.s32 %s257, %s255
      %s259 = smul.addr %s258, 8
      %s260 = scalar_lea.vmem %s4, %s259
      %v262 = vld [vmem:[%s242] sm:$0xff]
      %v263 = vpack.c.bf16 %v262, %v262
      %v264 = vld [vmem:[%s246] sm:$0xf]
      %v265 = vld [vmem:[%s246 + $0x4] sm:$0xf]
      %v266 = vld [vmem:[%s249] sm:$0x1]
      %v268 = vperm.slane %v266, 0
      %v272 = vunpack.c.l.b16 %v264
      %v273 = vunpack.c.l.b16 %v265
      %v274 = vpack.c.b16 %v273, %v272
      %vm276 = vcmask 130048
      %v278 = vsel %vm276, %v263, 0
      %280 = vmatpush.bf16.msra.mxu0 0
      %281 = vmatpush.bf16.msra.mxu0 0
      %282 = vmatpush.bf16.msra.mxu0 0
      %283 = vmatpush.bf16.msra.mxu0 0
      %284 = vmatpush.bf16.msra.mxu0 0
      %285 = vmatpush.bf16.msra.mxu0 0
      %286 = vmatpush.bf16.msra.mxu0 0
      %287 = vmatpush.bf16.msra.mxu0 %v274
      %288 = vmatmul.bf16.gmra.mxu0 %v278
      %v289 = vpop.f32.mrf.mxu0
      %v290 = vadd.f32 %v268, %v289
      %v291 = vpop.f32.mrf.mxu0
      %292 = vdwg.mxu0
      %v293 = vld [vmem:[%s253] sm:$0xff]
      %v294 = vadd.f32 %v290, %v293
      %vm295 = vcmask 261120
      %296 = vst.msk [vmem:[%s260] sm:$0xff] %vm295, %v294
      %p297 = scmp.lt.s32.totalorder %s19, 1
      %s298 = scalar_select %p297, %s19, 1
      %p299 = scmp.lt.s32.totalorder %s20, 0
      %s300 = scalar_select %p299, %s20, 0
      %s301 = sadd.s32 %s300, %s298
      %s302 = smul.addr %s301, 8
      %s303 = scalar_lea.vmem %s4, %s302
      // Predicated region
      $region37: #{transformer_encoder.10} parent=35 // pred_check
        %p304 = pneg %p151
      $region38: #{transformer_encoder.10} parent=35 // pred_check_branch
        %306 = sbr.rel (%p304) target = $region40
      $region39: #{transformer_encoder.10} parent=35 // pred_region
        _
      $region40: #{transformer_encoder.10} parent=35 // pred_fallthru
        _
    $region36: #{transformer_encoder.10} parent=5 // pred_fallthru
      _
    %p307 = scmp.le.s32.totalorder 2, %s10
    // Predicated region
    $region41: #{transformer_encoder.10} parent=5 // pred_check
      %p308 = pneg %p307
    $region42: #{transformer_encoder.10} parent=5 // pred_check_branch
      %310 = sbr.rel (%p308) target = $region44
    $region43: #{transformer_encoder.10} parent=5 // pred_region
      %s311 = ssub.s32 %s10, 2
      // Predicated region
      $region45: #{transformer_encoder.10} parent=43 // pred_check
        %p312 = pneg %p157
      $region46: #{transformer_encoder.10} parent=43 // pred_check_branch
        %314 = sbr.rel (%p312) target = $region48
      $region47: #{transformer_encoder.10} parent=43 // pred_region
        %p315 = scmp.lt.s32.totalorder %s21, 1
        %s316 = scalar_select %p315, %s21, 1
        %p317 = scmp.lt.s32.totalorder %s22, 0
        %s318 = scalar_select %p317, %s22, 0
        %s319 = sadd.s32 %s318, %s316
        %s320 = smul.addr %s319, 8
        %s321 = scalar_lea.vmem %s4, %s320
      $region48: #{transformer_encoder.10} parent=43 // pred_fallthru
        _
    $region44: #{transformer_encoder.10} parent=5 // pred_fallthru
      _
  $region6: #{transformer_encoder.10} parent=0 // loop_footer
    %s14 = sadd.s32 1, %s10
  $region7: #{transformer_encoder.10} parent=0 // loop_footer_branch
    %9 = sbr.rel target = $region3
  $region8: #{transformer_encoder.10} parent=0 // loop_exit
    _

// kernel: transformer_encoder.11
$region0: #{transformer_encoder.11}
  #allocation0 [shape = 'u32[]', space=smem, size = 0x4, offset = 0x4, fixed_abs, tag = 'smem constant byte address 0x4 - core index']
  #allocation1 [shape = 'u32[72,128]{1,0:T(1,128)}', space=vmem, size = 0x9000, scoped, tag = 'internal scratch']
  #allocation2 [shape = 'bf16[16,32]{1,0:T(8,128)(2,1)}', space=vmem, size = 0x1000, scoped, tag = 'scratch operand']
  %s0 = inlined_call_operand.vmem [shape: f32[16,32], index: 0, kind: input, shape index: {}]
  %s1 = inlined_call_operand.vmem [shape: f32[1,32], index: 1, kind: input, shape index: {}]
  %s2 = inlined_call_operand.vmem [shape: f32[1,32], index: 2, kind: input, shape index: {}]
  %s3 = inlined_call_operand.vmem [shape: bf16[32,96], index: 3, kind: input, shape index: {}]
  %s4 = inlined_call_operand.vmem [shape: f32[1,96], index: 4, kind: input, shape index: {}]
  %s5 = inlined_call_operand.vmem [shape: bf16[16,96], index: 5, kind: output, shape index: {}]
  %s6 = sld [smem:[#allocation0]]
  $region34: #{transformer_encoder.11} parent=0
    _
  %s8 = ssub.s32 1, %s6
  %s9 = scalar_select 0, %s8, %s6
  // Predicated region
  $region2: #{transformer_encoder.11} parent=0 // pred_check
    _
  $region3: #{transformer_encoder.11} parent=0 // pred_check_branch
    %11 = sbr.rel (0) target = $region5
  $region4: #{transformer_encoder.11} parent=0 // pred_region
    _
  $region5: #{transformer_encoder.11} parent=0 // pred_fallthru
    _
  // Predicated region
  $region6: #{transformer_encoder.11} parent=0 // pred_check
    _
  $region7: #{transformer_encoder.11} parent=0 // pred_check_branch
    %13 = sbr.rel (0) target = $region9
  $region8: #{transformer_encoder.11} parent=0 // pred_region
    _
  $region9: #{transformer_encoder.11} parent=0 // pred_fallthru
    _
  // Predicated region
  $region10: #{transformer_encoder.11} parent=0 // pred_check
    _
  $region11: #{transformer_encoder.11} parent=0 // pred_check_branch
    %15 = sbr.rel (0) target = $region13
  $region12: #{transformer_encoder.11} parent=0 // pred_region
    _
  $region13: #{transformer_encoder.11} parent=0 // pred_fallthru
    _
  // Predicated region
  $region14: #{transformer_encoder.11} parent=0 // pred_check
    _
  $region15: #{transformer_encoder.11} parent=0 // pred_check_branch
    %17 = sbr.rel (0) target = $region17
  $region16: #{transformer_encoder.11} parent=0 // pred_region
    _
  $region17: #{transformer_encoder.11} parent=0 // pred_fallthru
    _
  // Predicated region
  $region18: #{transformer_encoder.11} parent=0 // pred_check
    _
  $region19: #{transformer_encoder.11} parent=0 // pred_check_branch
    %19 = sbr.rel (0) target = $region21
  $region20: #{transformer_encoder.11} parent=0 // pred_region
    _
  $region21: #{transformer_encoder.11} parent=0 // pred_fallthru
    _
  %p21 = scmp.eq.s32.totalorder 0, 0
  // Predicated region
  $region22: #{transformer_encoder.11} parent=0 // pred_check
    %p22 = pneg %p21
  $region23: #{transformer_encoder.11} parent=0 // pred_check_branch
    %24 = sbr.rel (%p22) target = $region25
  $region24: #{transformer_encoder.11} parent=0 // pred_region
    %v25 = vld [vmem:[%s0] sm:$0xff]
    %v26 = vld [vmem:[%s0 + $0x8] sm:$0xff]
    %vm27 = vcmask 261120
    %v28 = vsel %vm27, %v25, 0.0
    %29 = vadd.xlane.f32.xlu0 %v28
    %v30 = vpop.xlane.xlu0 %29
    %v31 = vsel %vm27, %v26, 0.0
    %32 = vadd.xlane.f32.xlu0 %v31
    %v33 = vpop.xlane.xlu0 %32
    %v34 = vrcp.pop 32.0
    %v35 = vmul.f32 32.0, %v34
    %v36 = vsub.f32 1.0, %v35
    %v37 = vmul.f32 %v34, %v36
    %v38 = vadd.f32 %v34, %v37
    %vm39 = vweird.f32 %v34
    %v40 = vsel %vm39, %v34, %v38
    %v41 = vmul.f32 %v30, %v40
    %v42 = vmul.f32 %v33, %v40
    %v43 = vsub.f32 %v25, %v41
    %v44 = vsub.f32 %v26, %v42
    %v45 = vmul.f32 %v43, %v43
    %v46 = vmul.f32 %v44, %v44
    %v47 = vsel %vm27, %v45, 0.0
    %48 = vadd.xlane.f32.xlu0 %v47
    %v49 = vpop.xlane.xlu0 %48
    %v50 = vsel %vm27, %v46, 0.0
    %51 = vadd.xlane.f32.xlu0 %v50
    %v52 = vpop.xlane.xlu0 %51
    %v53 = vmul.f32 %v49, %v40
    %v54 = vmul.f32 %v52, %v40
    %v55 = vadd.f32 %v53, 1e-05
    %v56 = vadd.f32 %v54, 1e-05
    %v57 = vrsqrt.pop %v55
    %v58 = vmul.f32 %v57, %v55
    %v59 = vmul.f32 %v58, %v57
    %v60 = vmul.f32 0.5, %v59
    %v61 = vsub.f32 1.5, %v60
    %v62 = vmul.f32 %v57, %v61
    %vm63 = vweird.f32 %v55
    %vm64 = vweird.f32 %v57
    %vm65 = vmor %vm63, %vm64
    %v66 = vsel %vm65, %v57, %v62
    %v67 = vrsqrt.pop %v56
    %v68 = vmul.f32 %v67, %v56
    %v69 = vmul.f32 %v68, %v67
    %v70 = vmul.f32 0.5, %v69
    %v71 = vsub.f32 1.5, %v70
    %v72 = vmul.f32 %v67, %v71
    %vm73 = vweird.f32 %v56
    %vm74 = vweird.f32 %v67
    %vm75 = vmor %vm73, %vm74
    %v76 = vsel %vm75, %v67, %v72
    %v77 = vmul.f32 %v43, %v66
    %v78 = vmul.f32 %v44, %v76
    %v79 = vld [vmem:[%s1] sm:$0x1]
    %v81 = vperm.slane %v79, 0
    %v83 = vmul.f32 %v77, %v81
    %v84 = vmul.f32 %v78, %v81
    %v85 = vld [vmem:[%s2] sm:$0x1]
    %v87 = vperm.slane %v85, 0
    %v89 = vadd.f32 %v83, %v87
    %v90 = vadd.f32 %v84, %v87
    %v91 = vpack.c.bf16 %v89, %v89
    %v92 = vpack.c.bf16 %v90, %v90
    %vm93 = vcmask 257024
    %94 = vst.msk [vmem:[#allocation2] sm:$0xf] %vm93, %v91
    %95 = vst.msk [vmem:[#allocation2 + $0x4] sm:$0xf] %vm93, %v92
  $region25: #{transformer_encoder.11} parent=0 // pred_fallthru
    _
  %v96 = vld [vmem:[#allocation2] sm:$0xf]
  %v97 = vld [vmem:[#allocation2 + $0x4] sm:$0xf]
  %v98 = vld [vmem:[%s3] sm:$0xf]
  %v99 = vld [vmem:[%s3 + $0x4] sm:$0xf]
  %v100 = vld [vmem:[%s3 + $0x8] sm:$0xf]
  %v101 = vld [vmem:[%s3 + $0xc] sm:$0xf]
  %v102 = vld [vmem:[%s4] sm:$0x1]
  %v104 = vperm.slane %v102, 0
  %v108 = vunpack.c.l.b16 %v96
  %v109 = vunpack.c.l.b16 %v97
  %v110 = vpack.c.b16 %v109, %v108
  %v115 = vunpack.c.l.b16 %v98
  %v116 = vunpack.c.l.b16 %v99
  %v117 = vunpack.c.l.b16 %v100
  %v118 = vunpack.c.l.b16 %v101
  %v119 = vpack.c.b16 %v116, %v115
  %v120 = vpack.c.b16 %v118, %v117
  %vm123 = vcmask 261120
  %v125 = vsel %vm123, %v110, 0
  %127 = vmatpush.bf16.msra.mxu0 0
  %128 = vmatpush.bf16.msra.mxu0 0
  %129 = vmatpush.bf16.msra.mxu0 0
  %130 = vmatpush.bf16.msra.mxu0 0
  %131 = vmatpush.bf16.msra.mxu0 0
  %132 = vmatpush.bf16.msra.mxu0 0
  %133 = vmatpush.bf16.msra.mxu0 %v120
  %134 = vmatpush.bf16.msra.mxu0 %v119
  %135 = vmatmul.bf16.gmra.mxu0 %v125
  %v136 = vpop.f32.mrf.mxu0
  %v137 = vadd.f32 %v104, %v136
  %v138 = vpop.f32.mrf.mxu0
  %v139 = vadd.f32 %v104, %v138
  %140 = vdwg.mxu0
  %v141 = vpack.c.bf16 %v137, %v137
  %v142 = vpack.c.bf16 %v139, %v139
  %vm143 = vcmask 781312
  %144 = vst.msk [vmem:[%s5] sm:$0xf] %vm143, %v141
  %145 = vst.msk [vmem:[%s5 + $0x4] sm:$0xf] %vm143, %v142
  // Predicated region
  $region26: #{transformer_encoder.11} parent=0 // pred_check
    _
  $region27: #{transformer_encoder.11} parent=0 // pred_check_branch
    %147 = sbr.rel (0) target = $region29
  $region28: #{transformer_encoder.11} parent=0 // pred_region
    _
  $region29: #{transformer_encoder.11} parent=0 // pred_fallthru
    _
  // Predicated region
  $region30: #{transformer_encoder.11} parent=0 // pred_check
    _
  $region31: #{transformer_encoder.11} parent=0 // pred_check_branch
    %149 = sbr.rel (0) target = $region33
  $region32: #{transformer_encoder.11} parent=0 // pred_region
    _
  $region33: #{transformer_encoder.11} parent=0 // pred_fallthru
    _

// kernel: transformer_encoder.12
$region0: #{transformer_encoder.12}
  #allocation0 [shape = 'u32[]', space=smem, size = 0x4, offset = 0x4, fixed_abs, tag = 'smem constant byte address 0x4 - core index']
  #allocation1 [shape = 'u32[72,128]{1,0:T(1,128)}', space=vmem, size = 0x9000, scoped, tag = 'internal scratch']
  #allocation2 [shape = 'f32[8,1]{1,0:T(8,128)}', space=vmem, size = 0x1000, scoped, tag = 'scratch operand']
  #allocation3 [shape = 'f32[8,1]{1,0:T(8,128)}', space=vmem, size = 0x1000, scoped, tag = 'scratch operand']
  #allocation4 [shape = 'f32[8,8]{1,0:T(8,128)}', space=vmem, size = 0x1000, scoped, tag = 'scratch operand']
  %s0 = inlined_call_operand.vmem [shape: bf16[8,8,8], index: 0, kind: input, shape index: {}]
  %s1 = inlined_call_operand.vmem [shape: bf16[8,8,8], index: 1, kind: input, shape index: {}]
  %s2 = inlined_call_operand.vmem [shape: bf16[8,8,8], index: 2, kind: input, shape index: {}]
  %s3 = inlined_call_operand.vmem [shape: bf16[8,8,8], index: 3, kind: output, shape index: {}]
  %s4 = sld [smem:[#allocation0]]
  $region53: #{transformer_encoder.12} parent=0
    _
  %s6 = ssub.s32 1, %s4
  %s7 = scalar_select 0, %s6, %s4
  loop: start=0, step=1, limit=10
  $region2: #{transformer_encoder.12} parent=0 // loop_pre_header
    _
  $region3: #{transformer_encoder.12} parent=0 // loop_header
    %s9 = sphi 0, %s13
    %p10 = scmp.ge.s32.totalorder %s9, 10
    %s16 = sphi 0, %s35
    %s17 = sphi 0, %s31
    %s18 = sphi 0, %s27
    %s19 = sphi 0, %s16
    %s20 = sphi 0, %s17
    %s21 = sphi 0, %s18
    %s22 = sphi 0, %s19
    %s23 = sphi 0, %s20
    %s24 = sphi 0, %s21
    %s40 = sphi 0, %s42
    %s43 = sphi 0, %s40
    %s44 = sphi 0, %s43
    %s60 = sphi 0, %s44
    %s68 = sphi 0, %s70
    %s71 = sphi 0, %s68
    %s72 = sphi 0, %s71
    %s88 = sphi 0, %s72
    %s96 = sphi 0, %s98
    %s99 = sphi 0, %s96
    %s100 = sphi 0, %s99
    %s116 = sphi 0, %s100
    %s124 = sphi 0, %s126
    %s127 = sphi 0, %s124
    %s128 = sphi 0, %s127
    %s144 = sphi 0, %s128
  $region4: #{transformer_encoder.12} parent=0 // loop_header_branch
    %12 = sbr.rel (%p10) target = $region8
  $region5: #{transformer_encoder.12} parent=0 // loop_body
    %s14 = ssub.s32 %s9, 1
    %s15 = ssub.s32 %s9, 2
    %s25 = sadd.s32 1, %s18
    %p26 = scmp.ge.s32.totalorder %s25, 1
    %s27 = scalar_select %p26, 0, %s25
    %s28 = sadd.s32 1, %s17
    %s29 = scalar_select %p26, %s28, %s17
    %p30 = scmp.ge.s32.totalorder %s29, 1
    %s31 = scalar_select %p30, 0, %s29
    %s32 = sadd.s32 1, %s16
    %s33 = scalar_select %p30, %s32, %s16
    %p34 = scmp.ge.s32.totalorder %s33, 8
    %s35 = scalar_select %p34, 0, %s33
    %s36 = ssub.s32 %s16, %s35
    %s37 = ssub.s32 %s17, %s31
    %s38 = sor.u32 %s36, %s37
    %p39 = scmp.eq.s32.totalorder %s38, 0
    %s41 = sadd.s32 %s40, 1
    %s42 = scalar_select %p39, %s40, %s41
    %p45 = pneg %p39
    %p46 = scmp.eq.s32.totalorder %s9, 7
    %p47 = por %p45, %p46
    %p48 = scmp.ne.s32.totalorder %s40, %s43
    %p49 = scmp.eq.s32.totalorder %s9, 0
    %p50 = por %p48, %p49
    %p51 = scmp.ne.s32.totalorder %s40, %s43
    %p52 = scmp.eq.s32.totalorder %s14, 7
    %p53 = por %p51, %p52
    %p54 = scmp.ne.s32.totalorder %s43, %s44
    %p55 = scmp.eq.s32.totalorder %s14, 0
    %p56 = por %p54, %p55
    %p57 = scmp.ne.s32.totalorder %s43, %s44
    %p58 = scmp.eq.s32.totalorder %s15, 7
    %p59 = por %p57, %p58
    %p61 = scmp.ne.s32.totalorder %s44, %s60
    %p62 = scmp.eq.s32.totalorder %s15, 0
    %p63 = por %p61, %p62
    %s64 = ssub.s32 %s16, %s35
    %s65 = ssub.s32 %s18, %s27
    %s66 = sor.u32 %s64, %s65
    %p67 = scmp.eq.s32.totalorder %s66, 0
    %s69 = sadd.s32 %s68, 1
    %s70 = scalar_select %p67, %s68, %s69
    %p73 = pneg %p67
    %p74 = scmp.eq.s32.totalorder %s9, 7
    %p75 = por %p73, %p74
    %p76 = scmp.ne.s32.totalorder %s68, %s71
    %p77 = scmp.eq.s32.totalorder %s9, 0
    %p78 = por %p76, %p77
    %p79 = scmp.ne.s32.totalorder %s68, %s71
    %p80 = scmp.eq.s32.totalorder %s14, 7
    %p81 = por %p79, %p80
    %p82 = scmp.ne.s32.totalorder %s71, %s72
    %p83 = scmp.eq.s32.totalorder %s14, 0
    %p84 = por %p82, %p83
    %p85 = scmp.ne.s32.totalorder %s71, %s72
    %p86 = scmp.eq.s32.totalorder %s15, 7
    %p87 = por %p85, %p86
    %p89 = scmp.ne.s32.totalorder %s72, %s88
    %p90 = scmp.eq.s32.totalorder %s15, 0
    %p91 = por %p89, %p90
    %s92 = ssub.s32 %s16, %s35
    %s93 = ssub.s32 %s18, %s27
    %s94 = sor.u32 %s92, %s93
    %p95 = scmp.eq.s32.totalorder %s94, 0
    %s97 = sadd.s32 %s96, 1
    %s98 = scalar_select %p95, %s96, %s97
    %p101 = pneg %p95
    %p102 = scmp.eq.s32.totalorder %s9, 7
    %p103 = por %p101, %p102
    %p104 = scmp.ne.s32.totalorder %s96, %s99
    %p105 = scmp.eq.s32.totalorder %s9, 0
    %p106 = por %p104, %p105
    %p107 = scmp.ne.s32.totalorder %s96, %s99
    %p108 = scmp.eq.s32.totalorder %s14, 7
    %p109 = por %p107, %p108
    %p110 = scmp.ne.s32.totalorder %s99, %s100
    %p111 = scmp.eq.s32.totalorder %s14, 0
    %p112 = por %p110, %p111
    %p113 = scmp.ne.s32.totalorder %s99, %s100
    %p114 = scmp.eq.s32.totalorder %s15, 7
    %p115 = por %p113, %p114
    %p117 = scmp.ne.s32.totalorder %s100, %s116
    %p118 = scmp.eq.s32.totalorder %s15, 0
    %p119 = por %p117, %p118
    %s120 = ssub.s32 %s16, %s35
    %s121 = ssub.s32 %s17, %s31
    %s122 = sor.u32 %s120, %s121
    %p123 = scmp.eq.s32.totalorder %s122, 0
    %s125 = sadd.s32 %s124, 1
    %s126 = scalar_select %p123, %s124, %s125
    %p129 = pneg %p123
    %p130 = scmp.eq.s32.totalorder %s9, 7
    %p131 = por %p129, %p130
    %p132 = scmp.ne.s32.totalorder %s124, %s127
    %p133 = scmp.eq.s32.totalorder %s9, 0
    %p134 = por %p132, %p133
    %p135 = scmp.ne.s32.totalorder %s124, %s127
    %p136 = scmp.eq.s32.totalorder %s14, 7
    %p137 = por %p135, %p136
    %p138 = scmp.ne.s32.totalorder %s127, %s128
    %p139 = scmp.eq.s32.totalorder %s14, 0
    %p140 = por %p138, %p139
    %p141 = scmp.ne.s32.totalorder %s127, %s128
    %p142 = scmp.eq.s32.totalorder %s15, 7
    %p143 = por %p141, %p142
    %p145 = scmp.ne.s32.totalorder %s128, %s144
    %p146 = scmp.eq.s32.totalorder %s15, 0
    %p147 = por %p145, %p146
    %p148 = scmp.le.s32.totalorder 1, %s9
    %p149 = scmp.lt.s32.totalorder %s9, 9
    %p150 = pnand %p148, %p149
    %p151 = pneg %p150
    // Predicated region
    $region9: #{transformer_encoder.12} parent=5 // pred_check
      _
    $region10: #{transformer_encoder.12} parent=5 // pred_check_branch
      %153 = sbr.rel (%p150) target = $region12
    $region11: #{transformer_encoder.12} parent=5 // pred_region
      %s154 = ssub.s32 %s9, 1
    $region12: #{transformer_encoder.12} parent=5 // pred_fallthru
      _
    %p155 = scmp.lt.s32.totalorder %s9, 8
    // Predicated region
    $region13: #{transformer_encoder.12} parent=5 // pred_check
      %p156 = pneg %p155
    $region14: #{transformer_encoder.12} parent=5 // pred_check_branch
      %158 = sbr.rel (%p156) target = $region16
    $region15: #{transformer_encoder.12} parent=5 // pred_region
      // Predicated region
      $region17: #{transformer_encoder.12} parent=15 // pred_check
        %p159 = pneg %p50
      $region18: #{transformer_encoder.12} parent=15 // pred_check_branch
        %161 = sbr.rel (%p159) target = $region20
      $region19: #{transformer_encoder.12} parent=15 // pred_region
        %p162 = scmp.lt.s32.totalorder %s16, 7
        %s163 = scalar_select %p162, %s16, 7
        %p164 = scmp.lt.s32.totalorder %s17, 0
        %s165 = scalar_select %p164, %s17, 0
        %s166 = sadd.s32 %s165, %s163
        %s167 = smul.addr %s166, 4
        %s168 = scalar_lea.vmem %s0, %s167
      $region20: #{transformer_encoder.12} parent=15 // pred_fallthru
        _
      // Predicated region
      $region21: #{transformer_encoder.12} parent=15 // pred_check
        %p169 = pneg %p78
      $region22: #{transformer_encoder.12} parent=15 // pred_check_branch
        %171 = sbr.rel (%p169) target = $region24
      $region23: #{transformer_encoder.12} parent=15 // pred_region
        %p172 = scmp.lt.s32.totalorder %s16, 7
        %s173 = scalar_select %p172, %s16, 7
        %p174 = scmp.lt.s32.totalorder %s18, 0
        %s175 = scalar_select %p174, %s18, 0
        %s176 = sadd.s32 %s175, %s173
        %s177 = smul.addr %s176, 4
        %s178 = scalar_lea.vmem %s1, %s177
      $region24: #{transformer_encoder.12} parent=15 // pred_fallthru
        _
      // Predicated region
      $region25: #{transformer_encoder.12} parent=15 // pred_check
        %p179 = pneg %p106
      $region26: #{transformer_encoder.12} parent=15 // pred_check_branch
        %181 = sbr.rel (%p179) target = $region28
      $region27: #{transformer_encoder.12} parent=15 // pred_region
        %p182 = scmp.lt.s32.totalorder %s16, 7
        %s183 = scalar_select %p182, %s16, 7
        %p184 = scmp.lt.s32.totalorder %s18, 0
        %s185 = scalar_select %p184, %s18, 0
        %s186 = sadd.s32 %s185, %s183
        %s187 = smul.addr %s186, 4
        %s188 = scalar_lea.vmem %s2, %s187
      $region28: #{transformer_encoder.12} parent=15 // pred_fallthru
        _
    $region16: #{transformer_encoder.12} parent=5 // pred_fallthru
      _
    %p189 = scmp.le.s32.totalorder 1, %s9
    %p190 = scmp.lt.s32.totalorder %s9, 9
    %p191 = pnand %p189, %p190
    %p192 = pneg %p191
    // Predicated region
    $region29: #{transformer_encoder.12} parent=5 // pred_check
      _
    $region30: #{transformer_encoder.12} parent=5 // pred_check_branch
      %194 = sbr.rel (%p191) target = $region32
    $region31: #{transformer_encoder.12} parent=5 // pred_region
      %s195 = ssub.s32 %s9, 1
      %p196 = scmp.lt.s32.totalorder %s19, 7
      %s197 = scalar_select %p196, %s19, 7
      %p198 = scmp.lt.s32.totalorder %s20, 0
      %s199 = scalar_select %p198, %s20, 0
      %s200 = sadd.s32 %s199, %s197
      %s201 = smul.addr %s200, 4
      %s202 = scalar_lea.vmem %s0, %s201
      %p203 = pneg %p56
      %p204 = pneg %p53
      %p205 = scmp.lt.s32.totalorder %s19, 7
      %s206 = scalar_select %p205, %s19, 7
      %p207 = scmp.lt.s32.totalorder %s21, 0
      %s208 = scalar_select %p207, %s21, 0
      %s209 = sadd.s32 %s208, %s206
      %s210 = smul.addr %s209, 4
      %s211 = scalar_lea.vmem %s1, %s210
      %p212 = pneg %p84
      %p213 = pneg %p81
      %p214 = scmp.lt.s32.totalorder %s19, 7
      %s215 = scalar_select %p214, %s19, 7
      %p216 = scmp.lt.s32.totalorder %s21, 0
      %s217 = scalar_select %p216, %s21, 0
      %s218 = sadd.s32 %s217, %s215
      %s219 = smul.addr %s218, 4
      %s220 = scalar_lea.vmem %s2, %s219
      %p221 = pneg %p112
      %p222 = pneg %p109
      %p223 = pneg %p140
      %p224 = pneg %p137
      %p225 = scmp.lt.s32.totalorder %s19, 7
      %s226 = scalar_select %p225, %s19, 7
      %p227 = scmp.lt.s32.totalorder %s20, 0
      %s228 = scalar_select %p227, %s20, 0
      %s229 = sadd.s32 %s228, %s226
      %s230 = smul.addr %s229, 4
      %s231 = scalar_lea.vmem %s3, %s230
      %p232 = scmp.lt.s32.totalorder %s19, 7
      %s233 = scalar_select %p232, %s19, 7
      %p234 = scmp.lt.s32.totalorder %s20, 0
      %s235 = scalar_select %p234, %s20, 0
      %s236 = sadd.s32 %s235, %s233
      %s237 = smul.addr %s236, 4
      %s238 = scalar_lea.vmem %s0, %s237
      %p239 = scmp.lt.s32.totalorder %s19, 7
      %s240 = scalar_select %p239, %s19, 7
      %p241 = scmp.lt.s32.totalorder %s21, 0
      %s242 = scalar_select %p241, %s21, 0
      %s243 = sadd.s32 %s242, %s240
      %s244 = smul.addr %s243, 4
      %s245 = scalar_lea.vmem %s1, %s244
      %p246 = scmp.lt.s32.totalorder %s19, 7
      %s247 = scalar_select %p246, %s19, 7
      %p248 = scmp.lt.s32.totalorder %s21, 0
      %s249 = scalar_select %p248, %s21, 0
      %s250 = sadd.s32 %s249, %s247
      %s251 = smul.addr %s250, 4
      %s252 = scalar_lea.vmem %s2, %s251
      %p253 = scmp.lt.s32.totalorder %s19, 7
      %s254 = scalar_select %p253, %s19, 7
      %p255 = scmp.lt.s32.totalorder %s20, 0
      %s256 = scalar_select %p255, %s20, 0
      %s257 = sadd.s32 %s256, %s254
      %s258 = smul.addr %s257, 4
      %s259 = scalar_lea.vmem %s3, %s258
      %p261 = scmp.eq.s32.totalorder %s21, 0
      // Predicated region
      $region33: #{transformer_encoder.12} parent=31 // pred_check
        %p262 = pneg %p261
      $region34: #{transformer_encoder.12} parent=31 // pred_check_branch
        %264 = sbr.rel (%p262) target = $region36
      $region35: #{transformer_encoder.12} parent=31 // pred_region
        %vm265 = vcmask 7168
        %266 = vst.msk [vmem:[#allocation2] sm:$0xff] %vm265, -inf
        %267 = vst.msk [vmem:[#allocation3] sm:$0xff] %vm265, 0.0
        %vm268 = vcmask 64512
        %269 = vst.msk [vmem:[#allocation4] sm:$0xff] %vm268, 0.0
      $region36: #{transformer_encoder.12} parent=31 // pred_fallthru
        _
      %v270 = vld [vmem:[%s238] sm:$0xf]
      %v271 = vld [vmem:[%s245] sm:$0xf]
      %v272 = vld [vmem:[%s252] sm:$0xf]
      %vm273 = vcmask 64512
      %v275 = vsel %vm273, %v270, 0
      %v278 = vsel %vm273, %v271, 0
      %280 = vmatpush.bf16.xpose.msra.mxu0 0
      %281 = vmatpush.bf16.xpose.msra.mxu0 0
      %282 = vmatpush.bf16.xpose.msra.mxu0 0
      %283 = vmatpush.bf16.xpose.msra.mxu0 0
      %284 = vmatpush.bf16.xpose.msra.mxu0 0
      %285 = vmatpush.bf16.xpose.msra.mxu0 0
      %286 = vmatpush.bf16.xpose.msra.mxu0 0
      %287 = vmatpush.bf16.xpose.msra.mxu0 %v278
      %288 = vmatmul.bf16.gmra.mxu0 %v275
      %v289 = vpop.f32.mrf.mxu0
      %v290 = vadd.f32 0.0, %v289
      %v291 = vpop.f32.mrf.mxu0
      %292 = vdwg.mxu0
      %v293 = vmul.f32 %v290, 0.35355338
      %v294 = vld [vmem:[#allocation2] sm:$0xff]
      %v295 = vsel %vm273, %v293, -inf
      %296 = vmax.xlane.f32.xlu0 %v295
      %v297 = vpop.xlane.xlu0 %296
      %v298 = vmax.f32 %v294, %v297
      %v299 = vsub.f32 %v294, %v298
      %v300 = vmul.f32 %v299, 1.442695
      %v301 = vpow.pop %v300
      %303 = vset.pattern.permute.xlu0 0
      %304 = vperm.xlu0 %303, %v298
      %v305 = vpop.permute.xlu0 %304
      %v307 = vsub.f32 %v293, %v305
      %v308 = vmul.f32 %v307, 1.442695
      %v309 = vpow.pop %v308
      %v310 = vld [vmem:[#allocation3] sm:$0xff]
      %v311 = vmul.f32 %v301, %v310
      %v312 = vsel %vm273, %v309, 0.0
      %313 = vadd.xlane.f32.xlu0 %v312
      %v314 = vpop.xlane.xlu0 %313
      %v315 = vadd.f32 %v311, %v314
      %vm316 = vcmask 7168
      %317 = vst.msk [vmem:[#allocation3] sm:$0xff] %vm316, %v315
      %v318 = vld [vmem:[#allocation4] sm:$0xff]
      %320 = vset.pattern.permute.xlu0 0
      %321 = vperm.xlu0 %320, %v301
      %v322 = vpop.permute.xlu0 %321
      %v324 = vmul.f32 %v322, %v318
      %v325 = vpack.c.bf16 %v309, %v309
      %v327 = vsel %vm273, %v325, 0
      %vm329 = vcmask 1043456
      %v331 = vsel %vm329, %v272, 0
      %333 = vmatpush.bf16.msra.mxu0 0
      %334 = vmatpush.bf16.msra.mxu0 0
      %335 = vmatpush.bf16.msra.mxu0 0
      %336 = vmatpush.bf16.msra.mxu0 0
      %337 = vmatpush.bf16.msra.mxu0 0
      %338 = vmatpush.bf16.msra.mxu0 0
      %339 = vmatpush.bf16.msra.mxu0 0
      %340 = vmatpush.bf16.msra.mxu0 %v331
      %341 = vmatmul.bf16.gmra.mxu0 %v327
      %v342 = vpop.f32.mrf.mxu0
      %v343 = vadd.f32 0.0, %v342
      %v344 = vpop.f32.mrf.mxu0
      %345 = vdwg.mxu0
      %v346 = vadd.f32 %v324, %v343
      %347 = vst.msk [vmem:[#allocation4] sm:$0xff] %vm273, %v346
      %348 = vst.msk [vmem:[#allocation2] sm:$0xff] %vm316, %v298
      // Predicated region
      $region37: #{transformer_encoder.12} parent=31 // pred_check
        %p349 = pneg %p261
      $region38: #{transformer_encoder.12} parent=31 // pred_check_branch
        %351 = sbr.rel (%p349) target = $region40
      $region39: #{transformer_encoder.12} parent=31 // pred_region
        %v352 = vld [vmem:[#allocation3] sm:$0xff]
        %v353 = vrcp.pop %v352
        %v354 = vld [vmem:[#allocation4] sm:$0xff]
        %356 = vset.pattern.permute.xlu0 0
        %357 = vperm.xlu0 %356, %v353
        %v358 = vpop.permute.xlu0 %357
        %v360 = vmul.f32 %v354, %v358
        %v361 = vpack.c.bf16 %v360, %v360
        %vm362 = vcmask 60416
        %363 = vst.msk [vmem:[%s259] sm:$0xf] %vm362, %v361
      $region40: #{transformer_encoder.12} parent=31 // pred_fallthru
        _
      %p364 = scmp.lt.s32.totalorder %s19, 7
      %s365 = scalar_select %p364, %s19, 7
      %p366 = scmp.lt.s32.totalorder %s20, 0
      %s367 = scalar_select %p366, %s20, 0
      %s368 = sadd.s32 %s367, %s365
      %s369 = smul.addr %s368, 4
      %s370 = scalar_lea.vmem %s3, %s369
      // Predicated region
      $region41: #{transformer_encoder.12} parent=31 // pred_check
        %p371 = pneg %p137
      $region42: #{transformer_encoder.12} parent=31 // pred_check_branch
        %373 = sbr.rel (%p371) target = $region44
      $region43: #{transformer_encoder.12} parent=31 // pred_region
        _
      $region44: #{transformer_encoder.12} parent=31 // pred_fallthru
        _
    $region32: #{transformer_encoder.12} parent=5 // pred_fallthru
      _
    %p374 = scmp.le.s32.totalorder 2, %s9
    // Predicated region
    $region45: #{transformer_encoder.12} parent=5 // pred_check
      %p375 = pneg %p374
    $region46: #{transformer_encoder.12} parent=5 // pred_check_branch
      %377 = sbr.rel (%p375) target = $region48
    $region47: #{transformer_encoder.12} parent=5 // pred_region
      %s378 = ssub.s32 %s9, 2
      // Predicated region
      $region49: #{transformer_encoder.12} parent=47 // pred_check
        %p379 = pneg %p143
      $region50: #{transformer_encoder.12} parent=47 // pred_check_branch
        %381 = sbr.rel (%p379) target = $region52
      $region51: #{transformer_encoder.12} parent=47 // pred_region
        %p382 = scmp.lt.s32.totalorder %s22, 7
        %s383 = scalar_select %p382, %s22, 7
        %p384 = scmp.lt.s32.totalorder %s23, 0
        %s385 = scalar_select %p384, %s23, 0
        %s386 = sadd.s32 %s385, %s383
        %s387 = smul.addr %s386, 4
        %s388 = scalar_lea.vmem %s3, %s387
      $region52: #{transformer_encoder.12} parent=47 // pred_fallthru
        _
    $region48: #{transformer_encoder.12} parent=5 // pred_fallthru
      _
  $region6: #{transformer_encoder.12} parent=0 // loop_footer
    %s13 = sadd.s32 1, %s9
  $region7: #{transformer_encoder.12} parent=0 // loop_footer_branch
    %8 = sbr.rel target = $region3
  $region8: #{transformer_encoder.12} parent=0 // loop_exit
    _

// kernel: transformer_encoder.13
$region0: #{transformer_encoder.13}
  #allocation0 [shape = 'u32[]', space=smem, size = 0x4, offset = 0x4, fixed_abs, tag = 'smem constant byte address 0x4 - core index']
  #allocation1 [shape = 'u32[72,128]{1,0:T(1,128)}', space=vmem, size = 0x9000, scoped, tag = 'internal scratch']
  %s0 = inlined_call_operand.vmem [shape: bf16[16,32], index: 0, kind: input, shape index: {}]
  %s1 = inlined_call_operand.vmem [shape: bf16[32,32], index: 1, kind: input, shape index: {}]
  %s2 = inlined_call_operand.vmem [shape: f32[1,32], index: 2, kind: input, shape index: {}]
  %s3 = inlined_call_operand.vmem [shape: f32[16,32], index: 3, kind: input, shape index: {}]
  %s4 = inlined_call_operand.vmem [shape: f32[16,32], index: 4, kind: output, shape index: {}]
  %s5 = sld [smem:[#allocation0]]
  $region26: #{transformer_encoder.13} parent=0
    _
  %s7 = ssub.s32 1, %s5
  %s8 = scalar_select 0, %s7, %s5
  // Predicated region
  $region2: #{transformer_encoder.13} parent=0 // pred_check
    _
  $region3: #{transformer_encoder.13} parent=0 // pred_check_branch
    %10 = sbr.rel (0) target = $region5
  $region4: #{transformer_encoder.13} parent=0 // pred_region
    _
  $region5: #{transformer_encoder.13} parent=0 // pred_fallthru
    _
  // Predicated region
  $region6: #{transformer_encoder.13} parent=0 // pred_check
    _
  $region7: #{transformer_encoder.13} parent=0 // pred_check_branch
    %12 = sbr.rel (0) target = $region9
  $region8: #{transformer_encoder.13} parent=0 // pred_region
    _
  $region9: #{transformer_encoder.13} parent=0 // pred_fallthru
    _
  // Predicated region
  $region10: #{transformer_encoder.13} parent=0 // pred_check
    _
  $region11: #{transformer_encoder.13} parent=0 // pred_check_branch
    %14 = sbr.rel (0) target = $region13
  $region12: #{transformer_encoder.13} parent=0 // pred_region
    _
  $region13: #{transformer_encoder.13} parent=0 // pred_fallthru
    _
  // Predicated region
  $region14: #{transformer_encoder.13} parent=0 // pred_check
    _
  $region15: #{transformer_encoder.13} parent=0 // pred_check_branch
    %16 = sbr.rel (0) target = $region17
  $region16: #{transformer_encoder.13} parent=0 // pred_region
    _
  $region17: #{transformer_encoder.13} parent=0 // pred_fallthru
    _
  %v18 = vld [vmem:[%s0] sm:$0xf]
  %v19 = vld [vmem:[%s0 + $0x4] sm:$0xf]
  %v20 = vld [vmem:[%s1] sm:$0xf]
  %v21 = vld [vmem:[%s1 + $0x4] sm:$0xf]
  %v22 = vld [vmem:[%s1 + $0x8] sm:$0xf]
  %v23 = vld [vmem:[%s1 + $0xc] sm:$0xf]
  %v24 = vld [vmem:[%s2] sm:$0x1]
  %v26 = vperm.slane %v24, 0
  %v30 = vunpack.c.l.b16 %v18
  %v31 = vunpack.c.l.b16 %v19
  %v32 = vpack.c.b16 %v31, %v30
  %v37 = vunpack.c.l.b16 %v20
  %v38 = vunpack.c.l.b16 %v21
  %v39 = vunpack.c.l.b16 %v22
  %v40 = vunpack.c.l.b16 %v23
  %v41 = vpack.c.b16 %v38, %v37
  %v42 = vpack.c.b16 %v40, %v39
  %vm45 = vcmask 261120
  %v47 = vsel %vm45, %v32, 0
  %49 = vmatpush.bf16.msra.mxu0 0
  %50 = vmatpush.bf16.msra.mxu0 0
  %51 = vmatpush.bf16.msra.mxu0 0
  %52 = vmatpush.bf16.msra.mxu0 0
  %53 = vmatpush.bf16.msra.mxu0 0
  %54 = vmatpush.bf16.msra.mxu0 0
  %55 = vmatpush.bf16.msra.mxu0 %v42
  %56 = vmatpush.bf16.msra.mxu0 %v41
  %57 = vmatmul.bf16.gmra.mxu0 %v47
  %v58 = vpop.f32.mrf.mxu0
  %v59 = vadd.f32 %v26, %v58
  %v60 = vpop.f32.mrf.mxu0
  %v61 = vadd.f32 %v26, %v60
  %62 = vdwg.mxu0
  %v63 = vld [vmem:[%s3] sm:$0xff]
  %v64 = vld [vmem:[%s3 + $0x8] sm:$0xff]
  %v65 = vadd.f32 %v59, %v63
  %v66 = vadd.f32 %v61, %v64
  %67 = vst.msk [vmem:[%s4] sm:$0xff] %vm45, %v65
  %68 = vst.msk [vmem:[%s4 + $0x8] sm:$0xff] %vm45, %v66
  // Predicated region
  $region18: #{transformer_encoder.13} parent=0 // pred_check
    _
  $region19: #{transformer_encoder.13} parent=0 // pred_check_branch
    %70 = sbr.rel (0) target = $region21
  $region20: #{transformer_encoder.13} parent=0 // pred_region
    _
  $region21: #{transformer_encoder.13} parent=0 // pred_fallthru
    _
  // Predicated region
  $region22: #{transformer_encoder.13} parent=0 // pred_check
    _
  $region23: #{transformer_encoder.13} parent=0 // pred_check_branch
    %72 = sbr.rel (0) target = $region25
  $region24: #{transformer_encoder.13} parent=0 // pred_region
    _
  $region25: #{transformer_encoder.13} parent=0 // pred_fallthru
    _

// kernel: transformer_encoder.19
$region0: #{transformer_encoder.19}
  #allocation0 [shape = 'u32[]', space=smem, size = 0x4, offset = 0x4, fixed_abs, tag = 'smem constant byte address 0x4 - core index']
  #allocation1 [shape = 'u32[72,128]{1,0:T(1,128)}', space=vmem, size = 0x9000, scoped, tag = 'internal scratch']
  %s0 = inlined_call_operand.vmem [shape: f32[16,32], index: 0, kind: input, shape index: {}]
  %s1 = inlined_call_operand.vmem [shape: f32[1,32], index: 1, kind: input, shape index: {}]
  %s2 = inlined_call_operand.vmem [shape: f32[1,32], index: 2, kind: input, shape index: {}]
  %s3 = inlined_call_operand.hbm [shape: f32[16,32], index: 3, kind: output, shape index: {}]
  %s4 = sld [smem:[#allocation0]]
  $region22: #{transformer_encoder.19} parent=0
    _
  %s6 = ssub.s32 1, %s4
  %s7 = scalar_select 0, %s6, %s4
  $region1: #{transformer_encoder.19} parent=0
    #allocation2 [shape = 'u8[8192]{0}', space=vmem, size = 0x2000, scoped, tag = 'output window, operand 0, single buffered']
    #allocation3 [shape = 's32[1]{0}', space=sflag, size = 0x4, scoped, tag = 'scoped memory for transformer_encoder.19']
    %8 = vsyncpa [#allocation3], 0
    // Predicated region
    $region2: #{transformer_encoder.19} parent=1 // pred_check
      _
    $region3: #{transformer_encoder.19} parent=1 // pred_check_branch
      %10 = sbr.rel (0) target = $region5
    $region4: #{transformer_encoder.19} parent=1 // pred_region
      _
    $region5: #{transformer_encoder.19} parent=1 // pred_fallthru
      _
    // Predicated region
    $region6: #{transformer_encoder.19} parent=1 // pred_check
      _
    $region7: #{transformer_encoder.19} parent=1 // pred_check_branch
      %12 = sbr.rel (0) target = $region9
    $region8: #{transformer_encoder.19} parent=1 // pred_region
      _
    $region9: #{transformer_encoder.19} parent=1 // pred_fallthru
      _
    // Predicated region
    $region10: #{transformer_encoder.19} parent=1 // pred_check
      _
    $region11: #{transformer_encoder.19} parent=1 // pred_check_branch
      %14 = sbr.rel (0) target = $region13
    $region12: #{transformer_encoder.19} parent=1 // pred_region
      _
    $region13: #{transformer_encoder.19} parent=1 // pred_fallthru
      _
    %v15 = vld [vmem:[%s0] sm:$0xff]
    %v16 = vld [vmem:[%s0 + $0x8] sm:$0xff]
    %vm17 = vcmask 261120
    %v18 = vsel %vm17, %v15, 0.0
    %19 = vadd.xlane.f32.xlu0 %v18
    %v20 = vpop.xlane.xlu0 %19
    %v21 = vsel %vm17, %v16, 0.0
    %22 = vadd.xlane.f32.xlu0 %v21
    %v23 = vpop.xlane.xlu0 %22
    %v24 = vrcp.pop 32.0
    %v25 = vmul.f32 32.0, %v24
    %v26 = vsub.f32 1.0, %v25
    %v27 = vmul.f32 %v24, %v26
    %v28 = vadd.f32 %v24, %v27
    %vm29 = vweird.f32 %v24
    %v30 = vsel %vm29, %v24, %v28
    %v31 = vmul.f32 %v20, %v30
    %v32 = vmul.f32 %v23, %v30
    %v33 = vsub.f32 %v15, %v31
    %v34 = vsub.f32 %v16, %v32
    %v35 = vmul.f32 %v33, %v33
    %v36 = vmul.f32 %v34, %v34
    %v37 = vsel %vm17, %v35, 0.0
    %38 = vadd.xlane.f32.xlu0 %v37
    %v39 = vpop.xlane.xlu0 %38
    %v40 = vsel %vm17, %v36, 0.0
    %41 = vadd.xlane.f32.xlu0 %v40
    %v42 = vpop.xlane.xlu0 %41
    %v43 = vmul.f32 %v39, %v30
    %v44 = vmul.f32 %v42, %v30
    %v45 = vadd.f32 %v43, 1e-05
    %v46 = vadd.f32 %v44, 1e-05
    %v47 = vrsqrt.pop %v45
    %v48 = vmul.f32 %v47, %v45
    %v49 = vmul.f32 %v48, %v47
    %v50 = vmul.f32 0.5, %v49
    %v51 = vsub.f32 1.5, %v50
    %v52 = vmul.f32 %v47, %v51
    %vm53 = vweird.f32 %v45
    %vm54 = vweird.f32 %v47
    %vm55 = vmor %vm53, %vm54
    %v56 = vsel %vm55, %v47, %v52
    %v57 = vrsqrt.pop %v46
    %v58 = vmul.f32 %v57, %v46
    %v59 = vmul.f32 %v58, %v57
    %v60 = vmul.f32 0.5, %v59
    %v61 = vsub.f32 1.5, %v60
    %v62 = vmul.f32 %v57, %v61
    %vm63 = vweird.f32 %v46
    %vm64 = vweird.f32 %v57
    %vm65 = vmor %vm63, %vm64
    %v66 = vsel %vm65, %v57, %v62
    %v67 = vmul.f32 %v33, %v56
    %v68 = vmul.f32 %v34, %v66
    %v69 = vld [vmem:[%s1] sm:$0x1]
    %v71 = vperm.slane %v69, 0
    %v73 = vmul.f32 %v67, %v71
    %v74 = vmul.f32 %v68, %v71
    %v75 = vld [vmem:[%s2] sm:$0x1]
    %v77 = vperm.slane %v75, 0
    %v79 = vadd.f32 %v73, %v77
    %v80 = vadd.f32 %v74, %v77
    %81 = vst.msk [vmem:[#allocation2] sm:$0xff] %vm17, %v79
    %82 = vst.msk [vmem:[#allocation2 + $0x8] sm:$0xff] %vm17, %v80
    // Predicated region
    $region14: #{transformer_encoder.19} parent=1 // pred_check
      _
    $region15: #{transformer_encoder.19} parent=1 // pred_check_branch
      %84 = sbr.rel (0) target = $region17
    $region16: #{transformer_encoder.19} parent=1 // pred_region
      %86 = vsyncadd [#allocation3], 0
      %s87 = sshll.u32 [#allocation2], 4
      %s88 = int_to_ptr.vmem [resolvable:$true] %s87
      %s89 = sshll.u32 %s3, 4
      %s90 = int_to_ptr.hbm [resolvable:$true] %s89
      %95 = dma.vmem_to_hbm [thread:$0]  %s88, 256, %s90, [#allocation3], 128, 128, 8
    $region17: #{transformer_encoder.19} parent=1 // pred_fallthru
      _
    // Predicated region
    $region18: #{transformer_encoder.19} parent=1 // pred_check
      _
    $region19: #{transformer_encoder.19} parent=1 // pred_check_branch
      %97 = sbr.rel (0) target = $region21
    $region20: #{transformer_encoder.19} parent=1 // pred_region
      %99 = dma.done [#allocation3], 256
    $region21: #{transformer_encoder.19} parent=1 // pred_fallthru
      _
    %100 = vsyncpa [#allocation3], 1

// kernel: transformer_encoder.14
$region0: #{transformer_encoder.14}
  #allocation0 [shape = 'u32[]', space=smem, size = 0x4, offset = 0x4, fixed_abs, tag = 'smem constant byte address 0x4 - core index']
  #allocation1 [shape = 'u32[72,128]{1,0:T(1,128)}', space=vmem, size = 0x9000, scoped, tag = 'internal scratch']
  #allocation2 [shape = 'bf16[16,32]{1,0:T(8,128)(2,1)}', space=vmem, size = 0x1000, scoped, tag = 'scratch operand']
  #allocation3 [shape = 'f32[16,32]{1,0:T(8,128)}', space=vmem, size = 0x2000, scoped, tag = 'scratch operand']
  %s0 = inlined_call_operand.vmem [shape: f32[16,32], index: 0, kind: input, shape index: {}, may-alias: {0,9}]
  %s1 = inlined_call_operand.vmem [shape: f32[1,32], index: 1, kind: input, shape index: {}]
  %s2 = inlined_call_operand.vmem [shape: f32[1,32], index: 2, kind: input, shape index: {}]
  %s3 = inlined_call_operand.vmem [shape: bf16[32,64], index: 3, kind: input, shape index: {}]
  %s4 = inlined_call_operand.vmem [shape: f32[1,64], index: 4, kind: input, shape index: {}]
  %s5 = inlined_call_operand.vmem [shape: bf16[32,64], index: 5, kind: input, shape index: {}]
  %s6 = inlined_call_operand.vmem [shape: f32[1,64], index: 6, kind: input, shape index: {}]
  %s7 = inlined_call_operand.vmem [shape: bf16[64,32], index: 7, kind: input, shape index: {}]
  %s8 = inlined_call_operand.vmem [shape: f32[1,32], index: 8, kind: input, shape index: {}]
  %s9 = inlined_call_operand.vmem [shape: f32[16,32], index: 9, kind: input, shape index: {}, may-alias: {0,9}]
  %s10 = inlined_call_operand.vmem [shape: f32[16,32], index: 10, kind: output, shape index: {}]
  %s11 = sld [smem:[#allocation0]]
  $region58: #{transformer_encoder.14} parent=0
    _
  %s13 = ssub.s32 1, %s11
  %s14 = scalar_select 0, %s13, %s11
  // Predicated region
  $region2: #{transformer_encoder.14} parent=0 // pred_check
    _
  $region3: #{transformer_encoder.14} parent=0 // pred_check_branch
    %16 = sbr.rel (0) target = $region5
  $region4: #{transformer_encoder.14} parent=0 // pred_region
    _
  $region5: #{transformer_encoder.14} parent=0 // pred_fallthru
    _
  // Predicated region
  $region6: #{transformer_encoder.14} parent=0 // pred_check
    _
  $region7: #{transformer_encoder.14} parent=0 // pred_check_branch
    %18 = sbr.rel (0) target = $region9
  $region8: #{transformer_encoder.14} parent=0 // pred_region
    _
  $region9: #{transformer_encoder.14} parent=0 // pred_fallthru
    _
  // Predicated region
  $region10: #{transformer_encoder.14} parent=0 // pred_check
    _
  $region11: #{transformer_encoder.14} parent=0 // pred_check_branch
    %20 = sbr.rel (0) target = $region13
  $region12: #{transformer_encoder.14} parent=0 // pred_region
    _
  $region13: #{transformer_encoder.14} parent=0 // pred_fallthru
    _
  // Predicated region
  $region14: #{transformer_encoder.14} parent=0 // pred_check
    _
  $region15: #{transformer_encoder.14} parent=0 // pred_check_branch
    %22 = sbr.rel (0) target = $region17
  $region16: #{transformer_encoder.14} parent=0 // pred_region
    _
  $region17: #{transformer_encoder.14} parent=0 // pred_fallthru
    _
  // Predicated region
  $region18: #{transformer_encoder.14} parent=0 // pred_check
    _
  $region19: #{transformer_encoder.14} parent=0 // pred_check_branch
    %24 = sbr.rel (0) target = $region21
  $region20: #{transformer_encoder.14} parent=0 // pred_region
    _
  $region21: #{transformer_encoder.14} parent=0 // pred_fallthru
    _
  // Predicated region
  $region22: #{transformer_encoder.14} parent=0 // pred_check
    _
  $region23: #{transformer_encoder.14} parent=0 // pred_check_branch
    %26 = sbr.rel (0) target = $region25
  $region24: #{transformer_encoder.14} parent=0 // pred_region
    _
  $region25: #{transformer_encoder.14} parent=0 // pred_fallthru
    _
  // Predicated region
  $region26: #{transformer_encoder.14} parent=0 // pred_check
    _
  $region27: #{transformer_encoder.14} parent=0 // pred_check_branch
    %28 = sbr.rel (0) target = $region29
  $region28: #{transformer_encoder.14} parent=0 // pred_region
    _
  $region29: #{transformer_encoder.14} parent=0 // pred_fallthru
    _
  // Predicated region
  $region30: #{transformer_encoder.14} parent=0 // pred_check
    _
  $region31: #{transformer_encoder.14} parent=0 // pred_check_branch
    %30 = sbr.rel (0) target = $region33
  $region32: #{transformer_encoder.14} parent=0 // pred_region
    _
  $region33: #{transformer_encoder.14} parent=0 // pred_fallthru
    _
  // Predicated region
  $region34: #{transformer_encoder.14} parent=0 // pred_check
    _
  $region35: #{transformer_encoder.14} parent=0 // pred_check_branch
    %32 = sbr.rel (0) target = $region37
  $region36: #{transformer_encoder.14} parent=0 // pred_region
    _
  $region37: #{transformer_encoder.14} parent=0 // pred_fallthru
    _
  // Predicated region
  $region38: #{transformer_encoder.14} parent=0 // pred_check
    _
  $region39: #{transformer_encoder.14} parent=0 // pred_check_branch
    %34 = sbr.rel (0) target = $region41
  $region40: #{transformer_encoder.14} parent=0 // pred_region
    _
  $region41: #{transformer_encoder.14} parent=0 // pred_fallthru
    _
  %p36 = scmp.eq.s32.totalorder 0, 0
  // Predicated region
  $region42: #{transformer_encoder.14} parent=0 // pred_check
    %p37 = pneg %p36
  $region43: #{transformer_encoder.14} parent=0 // pred_check_branch
    %39 = sbr.rel (%p37) target = $region45
  $region44: #{transformer_encoder.14} parent=0 // pred_region
    %v40 = vld [vmem:[%s0] sm:$0xff]
    %v41 = vld [vmem:[%s0 + $0x8] sm:$0xff]
    %vm42 = vcmask 261120
    %v43 = vsel %vm42, %v40, 0.0
    %44 = vadd.xlane.f32.xlu0 %v43
    %v45 = vpop.xlane.xlu0 %44
    %v46 = vsel %vm42, %v41, 0.0
    %47 = vadd.xlane.f32.xlu0 %v46
    %v48 = vpop.xlane.xlu0 %47
    %v49 = vrcp.pop 32.0
    %v50 = vmul.f32 32.0, %v49
    %v51 = vsub.f32 1.0, %v50
    %v52 = vmul.f32 %v49, %v51
    %v53 = vadd.f32 %v49, %v52
    %vm54 = vweird.f32 %v49
    %v55 = vsel %vm54, %v49, %v53
    %v56 = vmul.f32 %v45, %v55
    %v57 = vmul.f32 %v48, %v55
    %v58 = vsub.f32 %v40, %v56
    %v59 = vsub.f32 %v41, %v57
    %v60 = vmul.f32 %v58, %v58
    %v61 = vmul.f32 %v59, %v59
    %v62 = vsel %vm42, %v60, 0.0
    %63 = vadd.xlane.f32.xlu0 %v62
    %v64 = vpop.xlane.xlu0 %63
    %v65 = vsel %vm42, %v61, 0.0
    %66 = vadd.xlane.f32.xlu0 %v65
    %v67 = vpop.xlane.xlu0 %66
    %v68 = vmul.f32 %v64, %v55
    %v69 = vmul.f32 %v67, %v55
    %v70 = vadd.f32 %v68, 1e-05
    %v71 = vadd.f32 %v69, 1e-05
    %v72 = vrsqrt.pop %v70
    %v73 = vmul.f32 %v72, %v70
    %v74 = vmul.f32 %v73, %v72
    %v75 = vmul.f32 0.5, %v74
    %v76 = vsub.f32 1.5, %v75
    %v77 = vmul.f32 %v72, %v76
    %vm78 = vweird.f32 %v70
    %vm79 = vweird.f32 %v72
    %vm80 = vmor %vm78, %vm79
    %v81 = vsel %vm80, %v72, %v77
    %v82 = vrsqrt.pop %v71
    %v83 = vmul.f32 %v82, %v71
    %v84 = vmul.f32 %v83, %v82
    %v85 = vmul.f32 0.5, %v84
    %v86 = vsub.f32 1.5, %v85
    %v87 = vmul.f32 %v82, %v86
    %vm88 = vweird.f32 %v71
    %vm89 = vweird.f32 %v82
    %vm90 = vmor %vm88, %vm89
    %v91 = vsel %vm90, %v82, %v87
    %v92 = vmul.f32 %v58, %v81
    %v93 = vmul.f32 %v59, %v91
    %v94 = vld [vmem:[%s1] sm:$0x1]
    %v96 = vperm.slane %v94, 0
    %v98 = vmul.f32 %v92, %v96
    %v99 = vmul.f32 %v93, %v96
    %v100 = vld [vmem:[%s2] sm:$0x1]
    %v102 = vperm.slane %v100, 0
    %v104 = vadd.f32 %v98, %v102
    %v105 = vadd.f32 %v99, %v102
    %v106 = vpack.c.bf16 %v104, %v104
    %v107 = vpack.c.bf16 %v105, %v105
    %vm108 = vcmask 257024
    %109 = vst.msk [vmem:[#allocation2] sm:$0xf] %vm108, %v106
    %110 = vst.msk [vmem:[#allocation2 + $0x4] sm:$0xf] %vm108, %v107
    %111 = vst.msk [vmem:[#allocation3] sm:$0xff] %vm42, 0.0
    %112 = vst.msk [vmem:[#allocation3 + $0x8] sm:$0xff] %vm42, 0.0
  $region45: #{transformer_encoder.14} parent=0 // pred_fallthru
    _
  %v113 = vld [vmem:[#allocation2] sm:$0xf]
  %v114 = vld [vmem:[#allocation2 + $0x4] sm:$0xf]
  %v115 = vld [vmem:[%s3] sm:$0xf]
  %v116 = vld [vmem:[%s3 + $0x4] sm:$0xf]
  %v117 = vld [vmem:[%s3 + $0x8] sm:$0xf]
  %v118 = vld [vmem:[%s3 + $0xc] sm:$0xf]
  %v119 = vld [vmem:[%s4] sm:$0x1]
  %v121 = vperm.slane %v119, 0
  %v125 = vunpack.c.l.b16 %v113
  %v126 = vunpack.c.l.b16 %v114
  %v127 = vpack.c.b16 %v126, %v125
  %v132 = vunpack.c.l.b16 %v115
  %v133 = vunpack.c.l.b16 %v116
  %v134 = vunpack.c.l.b16 %v117
  %v135 = vunpack.c.l.b16 %v118
  %v136 = vpack.c.b16 %v133, %v132
  %v137 = vpack.c.b16 %v135, %v134
  %vm140 = vcmask 261120
  %v142 = vsel %vm140, %v127, 0
  %144 = vmatpush.bf16.msra.mxu0 0
  %145 = vmatpush.bf16.msra.mxu0 0
  %146 = vmatpush.bf16.msra.mxu0 0
  %147 = vmatpush.bf16.msra.mxu0 0
  %148 = vmatpush.bf16.msra.mxu0 0
  %149 = vmatpush.bf16.msra.mxu0 0
  %150 = vmatpush.bf16.msra.mxu0 %v137
  %151 = vmatpush.bf16.msra.mxu0 %v136
  %152 = vmatmul.bf16.gmra.mxu0 %v142
  %v153 = vpop.f32.mrf.mxu0
  %v154 = vadd.f32 %v121, %v153
  %v155 = vpop.f32.mrf.mxu0
  %v156 = vadd.f32 %v121, %v155
  %157 = vdwg.mxu0
  %v158 = vld [vmem:[%s5] sm:$0xf]
  %v159 = vld [vmem:[%s5 + $0x4] sm:$0xf]
  %v160 = vld [vmem:[%s5 + $0x8] sm:$0xf]
  %v161 = vld [vmem:[%s5 + $0xc] sm:$0xf]
  %v162 = vld [vmem:[%s6] sm:$0x1]
  %v164 = vperm.slane %v162, 0
  %v170 = vunpack.c.l.b16 %v158
  %v171 = vunpack.c.l.b16 %v159
  %v172 = vunpack.c.l.b16 %v160
  %v173 = vunpack.c.l.b16 %v161
  %v174 = vpack.c.b16 %v171, %v170
  %v175 = vpack.c.b16 %v173, %v172
  %178 = vmatpush.bf16.msra.mxu0 0
  %179 = vmatpush.bf16.msra.mxu0 0
  %180 = vmatpush.bf16.msra.mxu0 0
  %181 = vmatpush.bf16.msra.mxu0 0
  %182 = vmatpush.bf16.msra.mxu0 0
  %183 = vmatpush.bf16.msra.mxu0 0
  %184 = vmatpush.bf16.msra.mxu0 %v175
  %185 = vmatpush.bf16.msra.mxu0 %v174
  %186 = vmatmul.bf16.gmra.mxu0 %v142
  %v187 = vpop.f32.mrf.mxu0
  %v188 = vadd.f32 %v164, %v187
  %v189 = vpop.f32.mrf.mxu0
  %v190 = vadd.f32 %v164, %v189
  %191 = vdwg.mxu0
  %v192 = vxor.u32 %v154, 2147483648
  %v193 = vxor.u32 %v156, 2147483648
  %v194 = vmul.f32 %v192, 1.442695
  %v195 = vpow.pop %v194
  %v196 = vmul.f32 %v193, 1.442695
  %v197 = vpow.pop %v196
  %v198 = vadd.f32 %v195, 1.0
  %v199 = vadd.f32 %v197, 1.0
  %v200 = vrcp.pop %v198
  %v201 = vmul.f32 %v198, %v200
  %v202 = vsub.f32 1.0, %v201
  %v203 = vmul.f32 %v200, %v202
  %v204 = vadd.f32 %v200, %v203
  %vm205 = vweird.f32 %v198
  %vm206 = vweird.f32 %v200
  %vm207 = vmor %vm205, %vm206
  %v208 = vsel %vm207, %v200, %v204
  %v209 = vand.u32 2147483647, %v198
  %vm210 = vcmp.eq.f32.partialorder %v209, 8.507059e+37
  %v211 = vand.u32 %v198, 2147483648
  %v212 = vor.u32 1.1754944e-38, %v211
  %v213 = vsel %vm210, %v212, %v208
  %v214 = vmul.f32 1.0, %v213
  %v215 = vrcp.pop %v199
  %v216 = vmul.f32 %v199, %v215
  %v217 = vsub.f32 1.0, %v216
  %v218 = vmul.f32 %v215, %v217
  %v219 = vadd.f32 %v215, %v218
  %vm220 = vweird.f32 %v199
  %vm221 = vweird.f32 %v215
  %vm222 = vmor %vm220, %vm221
  %v223 = vsel %vm222, %v215, %v219
  %v224 = vand.u32 2147483647, %v199
  %vm225 = vcmp.eq.f32.partialorder %v224, 8.507059e+37
  %v226 = vand.u32 %v199, 2147483648
  %v227 = vor.u32 1.1754944e-38, %v226
  %v228 = vsel %vm225, %v227, %v223
  %v229 = vmul.f32 1.0, %v228
  %v230 = vmul.f32 %v154, %v214
  %v231 = vmul.f32 %v156, %v229
  %v232 = vmul.f32 %v230, %v188
  %v233 = vmul.f32 %v231, %v190
  %v234 = vld [vmem:[#allocation3] sm:$0xff]
  %v235 = vld [vmem:[#allocation3 + $0x8] sm:$0xff]
  %v236 = vpack.c.bf16 %v233, %v232
  %v237 = vld [vmem:[%s7] sm:$0xf]
  %v238 = vld [vmem:[%s7 + $0x4] sm:$0xf]
  %v239 = vld [vmem:[%s7 + $0x8] sm:$0xf]
  %v240 = vld [vmem:[%s7 + $0xc] sm:$0xf]
  %v241 = vld [vmem:[%s7 + $0x10] sm:$0xf]
  %v242 = vld [vmem:[%s7 + $0x14] sm:$0xf]
  %v243 = vld [vmem:[%s7 + $0x18] sm:$0xf]
  %v244 = vld [vmem:[%s7 + $0x1c] sm:$0xf]
  %v253 = vunpack.c.l.b16 %v237
  %v254 = vunpack.c.l.b16 %v238
  %v255 = vunpack.c.l.b16 %v239
  %v256 = vunpack.c.l.b16 %v240
  %v257 = vunpack.c.l.b16 %v241
  %v258 = vunpack.c.l.b16 %v242
  %v259 = vunpack.c.l.b16 %v243
  %v260 = vunpack.c.l.b16 %v244
  %v261 = vpack.c.b16 %v254, %v253
  %v262 = vpack.c.b16 %v256, %v255
  %v263 = vpack.c.b16 %v258, %v257
  %v264 = vpack.c.b16 %v260, %v259
  %vm269 = vcmask 523264
  %v271 = vsel %vm269, %v236, 0
  %273 = vmatpush.bf16.msra.mxu0 0
  %274 = vmatpush.bf16.msra.mxu0 0
  %275 = vmatpush.bf16.msra.mxu0 0
  %276 = vmatpush.bf16.msra.mxu0 0
  %277 = vmatpush.bf16.msra.mxu0 %v264
  %278 = vmatpush.bf16.msra.mxu0 %v263
  %279 = vmatpush.bf16.msra.mxu0 %v262
  %280 = vmatpush.bf16.msra.mxu0 %v261
  %281 = vmatmul.bf16.gmra.mxu0 %v271
  %v282 = vpop.f32.mrf.mxu0
  %v283 = vadd.f32 0.0, %v282
  %v284 = vpop.f32.mrf.mxu0
  %v285 = vadd.f32 0.0, %v284
  %286 = vdwg.mxu0
  %v287 = vadd.f32 %v234, %v283
  %v288 = vadd.f32 %v235, %v285
  %289 = vst.msk [vmem:[#allocation3] sm:$0xff] %vm140, %v287
  %290 = vst.msk [vmem:[#allocation3 + $0x8] sm:$0xff] %vm140, %v288
  // Predicated region
  $region46: #{transformer_encoder.14} parent=0 // pred_check
    %p291 = pneg %p36
  $region47: #{transformer_encoder.14} parent=0 // pred_check_branch
    %293 = sbr.rel (%p291) target = $region49
  $region48: #{transformer_encoder.14} parent=0 // pred_region
    %v294 = vld [vmem:[#allocation3] sm:$0xff]
    %v295 = vld [vmem:[#allocation3 + $0x8] sm:$0xff]
    %v296 = vld [vmem:[%s8] sm:$0x1]
    %v298 = vperm.slane %v296, 0
    %v300 = vadd.f32 %v294, %v298
    %v301 = vadd.f32 %v295, %v298
    %v302 = vld [vmem:[%s9] sm:$0xff]
    %v303 = vld [vmem:[%s9 + $0x8] sm:$0xff]
    %v304 = vadd.f32 %v300, %v302
    %v305 = vadd.f32 %v301, %v303
    %306 = vst.msk [vmem:[%s10] sm:$0xff] %vm140, %v304
    %307 = vst.msk [vmem:[%s10 + $0x8] sm:$0xff] %vm140, %v305
  $region49: #{transformer_encoder.14} parent=0 // pred_fallthru
    _
  // Predicated region
  $region50: #{transformer_encoder.14} parent=0 // pred_check
    _
  $region51: #{transformer_encoder.14} parent=0 // pred_check_branch
    %309 = sbr.rel (0) target = $region53
  $region52: #{transformer_encoder.14} parent=0 // pred_region
    _
  $region53: #{transformer_encoder.14} parent=0 // pred_fallthru
    _
  // Predicated region
  $region54: #{transformer_encoder.14} parent=0 // pred_check
    _
  $region55: #{transformer_encoder.14} parent=0 // pred_check_branch
    %311 = sbr.rel (0) target = $region57
  $region56: #{transformer_encoder.14} parent=0 // pred_region
    _
  $region57: #{transformer_encoder.14} parent=0 // pred_fallthru
    _

</llo_original>
